<compile_context>
chip_gen: v7x
topology: tpu7x:2x2x1
jax: 0.10.0
libtpu: 0.0.40
codegen_flags: <defaults>
</compile_context>

<pallas_src>
import functools

import jax
import jax.numpy as jnp
from jax import lax
from jax.experimental import pallas as pl
from jax.experimental.pallas import tpu as pltpu

W_EMA = 0.7   # EMA momentum (reference: self.w_ema)
ALPHA = 0.5   # reference overrides the adaptive alpha with a constant 0.5


def _pick_batch_tile(batch):
    # Largest tile (multiple of 8, capped so the unrolled per-row DMA loops
    # stay small) that exactly divides the batch.
    for t in (64, 32, 16, 8):
        if batch % t == 0:
            return t
    return batch  # fall back to one full-batch block (block == full dim is legal)


def _ema_als_kernel(idx_ref,       # (B,)  int32 SMEM  (scalar prefetch: indexs)
                    outputs_ref,   # (TB, C)     VMEM
                    targets_ref,   # (TB, 1) i32 VMEM
                    ema_in_ref,    # (num_examp, C) HBM/ANY (aliased w/ output 0)
                    ema_out_ref,   # (num_examp, C) HBM/ANY (aliased w/ input)
                    loss_ref,      # (1, 1) f32  VMEM accumulator (resident)
                    rows_vmem,     # (TB, C)     VMEM scratch for EMA rows
                    copy_sem,      # scalar DMA semaphore
                    *, batch):
    i = pl.program_id(0)
    TB, C = outputs_ref.shape
    base = i * TB

    # ---- 1) start gathering this tile's EMA rows: HBM -> VMEM scratch -------
    for r in range(TB):
        row = idx_ref[base + r]
        pltpu.make_async_copy(ema_in_ref.at[pl.ds(row, 1), :],
                              rows_vmem.at[pl.ds(r, 1), :],
                              copy_sem).start()

    # ---- 2) loss for this tile (needs only outputs/targets; overlaps DMAs) --
    outputs = outputs_ref[...].astype(jnp.float32)                   # (TB, C)
    tgt = targets_ref[...]                                           # (TB, 1)
    class_ids = lax.broadcasted_iota(jnp.int32, (TB, C), 1)
    onehot = class_ids == tgt                                        # (TB, C) bool

    m = jnp.max(outputs, axis=-1, keepdims=True)
    shifted = outputs - m
    lse = jnp.log(jnp.sum(jnp.exp(shifted), axis=-1, keepdims=True))
    logp = shifted - lse                                             # (TB, C)

    logp_tgt = jnp.sum(jnp.where(onehot, logp, 0.0), axis=-1, keepdims=True)
    sum_logp = jnp.sum(logp, axis=-1, keepdims=True)
    per_row = ALPHA * logp_tgt + ((1.0 - ALPHA) / C) * sum_logp      # (TB, 1)

    @pl.when(i == 0)
    def _init():
        loss_ref[...] = jnp.zeros_like(loss_ref)

    loss_ref[...] = loss_ref[...] + (-jnp.sum(per_row))

    @pl.when(i == pl.num_programs(0) - 1)
    def _finalize():
        loss_ref[...] = loss_ref[...] * (1.0 / batch)

    # ---- 3) wait for gathered rows, update EMA, scatter back: VMEM -> HBM ---
    for r in range(TB):
        pltpu.make_async_copy(ema_in_ref.at[pl.ds(0, 1), :],
                              rows_vmem.at[pl.ds(r, 1), :],
                              copy_sem).wait()

    ema_rows = rows_vmem[...].astype(jnp.float32)
    new_rows = W_EMA * ema_rows + (1.0 - W_EMA) * outputs
    rows_vmem[...] = new_rows.astype(rows_vmem.dtype)

    for r in range(TB):
        row = idx_ref[base + r]
        pltpu.make_async_copy(rows_vmem.at[pl.ds(r, 1), :],
                              ema_out_ref.at[pl.ds(row, 1), :],
                              copy_sem).start()
    for r in range(TB):
        pltpu.make_async_copy(rows_vmem.at[pl.ds(r, 1), :],
                              ema_out_ref.at[pl.ds(0, 1), :],
                              copy_sem).wait()


@functools.partial(jax.jit, donate_argnames=("ema",))
def ema_als_forward(ema, outputs, targets, epoch, indexs):
    """Returns (loss, new_ema). `ema` is the persistent (num_examp, C) table.

    `epoch` only feeds the adaptive-alpha path that the reference immediately
    overrides with a constant 0.5, so it never affects the result; it is kept
    for API parity with the PyTorch module.
    """
    del epoch  # dead in the reference forward (alpha is forced to 0.5)
    B, C = outputs.shape
    num_examp, _ = ema.shape
    TB = _pick_batch_tile(B)
    num_tiles = B // TB

    targets2d = targets.reshape(B, 1).astype(jnp.int32)
    indexs = indexs.astype(jnp.int32)

    grid_spec = pltpu.PrefetchScalarGridSpec(
        num_scalar_prefetch=1,                                # indexs -> SMEM
        grid=(num_tiles,),
        in_specs=[
            pl.BlockSpec((TB, C), lambda i, idx: (i, 0)),     # outputs tile
            pl.BlockSpec((TB, 1), lambda i, idx: (i, 0)),     # targets tile
            pl.BlockSpec(memory_space=pl.ANY),                # ema table (HBM)
        ],
        out_specs=(
            pl.BlockSpec(memory_space=pl.ANY),                # updated ema (aliased)
            pl.BlockSpec((1, 1), lambda i, idx: (0, 0)),      # loss accumulator
        ),
        scratch_shapes=[
            pltpu.VMEM((TB, C), ema.dtype),                   # gathered/new rows
            pltpu.SemaphoreType.DMA(()),                      # shared DMA sem
        ],
    )

    new_ema, loss = pl.pallas_call(
        functools.partial(_ema_als_kernel, batch=B),
        grid_spec=grid_spec,
        out_shape=(
            jax.ShapeDtypeStruct((num_examp, C), ema.dtype),
            jax.ShapeDtypeStruct((1, 1), jnp.float32),
        ),
        # args to the call are (indexs, outputs, targets2d, ema) -> ema is 3.
        input_output_aliases={3: 0},
        compiler_params=pltpu.CompilerParams(
            dimension_semantics=("arbitrary",)),              # loss accumulator
    )(indexs, outputs, targets2d, ema)

    return loss[0, 0], new_ema


if __name__ == "__main__":
    key = jax.random.PRNGKey(0)
    k1, k2, k3 = jax.random.split(key, 3)

    num_examp, num_class, batch = 64, 32, 8
    epoch = 10

    # Persistent EMA state (reference initializes it to zeros).
    ema = jnp.zeros((num_examp, num_class), jnp.float32)

    outputs = jax.random.normal(k1, (batch, num_class), jnp.float32)
    targets = jax.random.randint(k2, (batch,), 0, num_class, jnp.int32)
    # Unique example indices (in-place scatter must not collide, same as torch).
    indexs = jax.random.permutation(k3, num_examp)[:batch]

    loss, ema = ema_als_forward(ema, outputs, targets, epoch, indexs)
    jax.block_until_ready((loss, ema))
    print("KERNEL_OK")
</pallas_src>

<mosaic_0001>
module attributes {stable_mosaic.version = 11 : i64} {
  func.func @_ema_als_kernel(%arg0: i32, %arg1: memref<8xi32, #tpu.memory_space<smem>>, %arg2: memref<8x32xf32, #tpu.memory_space<vmem>>, %arg3: memref<8x1xi32, #tpu.memory_space<vmem>>, %arg4: memref<64x32xf32, #tpu.memory_space<any>>, %arg5: memref<64x32xf32, #tpu.memory_space<any>>, %arg6: memref<1x1xf32, #tpu.memory_space<vmem>>, %arg7: memref<8x32xf32, #tpu.memory_space<vmem>>, %arg8: memref<!tpu.dma_semaphore, #tpu.memory_space<semaphore_mem>>) attributes {dimension_semantics = [#tpu.dimension_semantics<arbitrary>], iteration_bounds = array<i64: 1>, scalar_prefetch = 1 : i64, scratch_operands = 2 : i64, tpu.core_type = #tpu.core_type<tc>, window_params = [{transform_indices = @transform_0, window_bounds = array<i64: 8, 32>}, {transform_indices = @transform_1, window_bounds = array<i64: 8, 1>}, {}, {}, {pipeline_mode = #tpu.pipeline_mode<synchronous>, transform_indices = @transform_4, window_bounds = array<i64: 1, 1>}]} {
    %c8_i32 = arith.constant 8 : i32
    %0 = arith.muli %arg0, %c8_i32 : i32
    %c0_i32 = arith.constant 0 : i32
    %1 = arith.addi %0, %c0_i32 : i32
    %2 = arith.index_cast %1 : i32 to index
    %3 = memref.load %arg1[%2] : memref<8xi32, #tpu.memory_space<smem>>
    %c0_i32_0 = arith.constant 0 : i32
    %4 = tpu.memref_slice %arg4[%3, %c0_i32_0] : memref<64x32xf32, #tpu.memory_space<any>> -> memref<1x32xf32, #tpu.memory_space<any>>
    %c0_i32_1 = arith.constant 0 : i32
    %c0_i32_2 = arith.constant 0 : i32
    %5 = tpu.memref_slice %arg7[%c0_i32_1, %c0_i32_2] : memref<8x32xf32, #tpu.memory_space<vmem>> -> memref<1x32xf32, #tpu.memory_space<vmem>>
    tpu.enqueue_dma source(%4 : memref<1x32xf32, #tpu.memory_space<any>>) target(%5 : memref<1x32xf32, #tpu.memory_space<vmem>>) target_semaphore(%arg8 : memref<!tpu.dma_semaphore, #tpu.memory_space<semaphore_mem>>)
    %c1_i32 = arith.constant 1 : i32
    %6 = arith.addi %0, %c1_i32 : i32
    %7 = arith.index_cast %6 : i32 to index
    %8 = memref.load %arg1[%7] : memref<8xi32, #tpu.memory_space<smem>>
    %c0_i32_3 = arith.constant 0 : i32
    %9 = tpu.memref_slice %arg4[%8, %c0_i32_3] : memref<64x32xf32, #tpu.memory_space<any>> -> memref<1x32xf32, #tpu.memory_space<any>>
    %c1_i32_4 = arith.constant 1 : i32
    %c0_i32_5 = arith.constant 0 : i32
    %10 = tpu.memref_slice %arg7[%c1_i32_4, %c0_i32_5] : memref<8x32xf32, #tpu.memory_space<vmem>> -> memref<1x32xf32, #tpu.memory_space<vmem>>
    tpu.enqueue_dma source(%9 : memref<1x32xf32, #tpu.memory_space<any>>) target(%10 : memref<1x32xf32, #tpu.memory_space<vmem>>) target_semaphore(%arg8 : memref<!tpu.dma_semaphore, #tpu.memory_space<semaphore_mem>>)
    %c2_i32 = arith.constant 2 : i32
    %11 = arith.addi %0, %c2_i32 : i32
    %12 = arith.index_cast %11 : i32 to index
    %13 = memref.load %arg1[%12] : memref<8xi32, #tpu.memory_space<smem>>
    %c0_i32_6 = arith.constant 0 : i32
    %14 = tpu.memref_slice %arg4[%13, %c0_i32_6] : memref<64x32xf32, #tpu.memory_space<any>> -> memref<1x32xf32, #tpu.memory_space<any>>
    %c2_i32_7 = arith.constant 2 : i32
    %c0_i32_8 = arith.constant 0 : i32
    %15 = tpu.memref_slice %arg7[%c2_i32_7, %c0_i32_8] : memref<8x32xf32, #tpu.memory_space<vmem>> -> memref<1x32xf32, #tpu.memory_space<vmem>>
    tpu.enqueue_dma source(%14 : memref<1x32xf32, #tpu.memory_space<any>>) target(%15 : memref<1x32xf32, #tpu.memory_space<vmem>>) target_semaphore(%arg8 : memref<!tpu.dma_semaphore, #tpu.memory_space<semaphore_mem>>)
    %c3_i32 = arith.constant 3 : i32
    %16 = arith.addi %0, %c3_i32 : i32
    %17 = arith.index_cast %16 : i32 to index
    %18 = memref.load %arg1[%17] : memref<8xi32, #tpu.memory_space<smem>>
    %c0_i32_9 = arith.constant 0 : i32
    %19 = tpu.memref_slice %arg4[%18, %c0_i32_9] : memref<64x32xf32, #tpu.memory_space<any>> -> memref<1x32xf32, #tpu.memory_space<any>>
    %c3_i32_10 = arith.constant 3 : i32
    %c0_i32_11 = arith.constant 0 : i32
    %20 = tpu.memref_slice %arg7[%c3_i32_10, %c0_i32_11] : memref<8x32xf32, #tpu.memory_space<vmem>> -> memref<1x32xf32, #tpu.memory_space<vmem>>
    tpu.enqueue_dma source(%19 : memref<1x32xf32, #tpu.memory_space<any>>) target(%20 : memref<1x32xf32, #tpu.memory_space<vmem>>) target_semaphore(%arg8 : memref<!tpu.dma_semaphore, #tpu.memory_space<semaphore_mem>>)
    %c4_i32 = arith.constant 4 : i32
    %21 = arith.addi %0, %c4_i32 : i32
    %22 = arith.index_cast %21 : i32 to index
    %23 = memref.load %arg1[%22] : memref<8xi32, #tpu.memory_space<smem>>
    %c0_i32_12 = arith.constant 0 : i32
    %24 = tpu.memref_slice %arg4[%23, %c0_i32_12] : memref<64x32xf32, #tpu.memory_space<any>> -> memref<1x32xf32, #tpu.memory_space<any>>
    %c4_i32_13 = arith.constant 4 : i32
    %c0_i32_14 = arith.constant 0 : i32
    %25 = tpu.memref_slice %arg7[%c4_i32_13, %c0_i32_14] : memref<8x32xf32, #tpu.memory_space<vmem>> -> memref<1x32xf32, #tpu.memory_space<vmem>>
    tpu.enqueue_dma source(%24 : memref<1x32xf32, #tpu.memory_space<any>>) target(%25 : memref<1x32xf32, #tpu.memory_space<vmem>>) target_semaphore(%arg8 : memref<!tpu.dma_semaphore, #tpu.memory_space<semaphore_mem>>)
    %c5_i32 = arith.constant 5 : i32
    %26 = arith.addi %0, %c5_i32 : i32
    %27 = arith.index_cast %26 : i32 to index
    %28 = memref.load %arg1[%27] : memref<8xi32, #tpu.memory_space<smem>>
    %c0_i32_15 = arith.constant 0 : i32
    %29 = tpu.memref_slice %arg4[%28, %c0_i32_15] : memref<64x32xf32, #tpu.memory_space<any>> -> memref<1x32xf32, #tpu.memory_space<any>>
    %c5_i32_16 = arith.constant 5 : i32
    %c0_i32_17 = arith.constant 0 : i32
    %30 = tpu.memref_slice %arg7[%c5_i32_16, %c0_i32_17] : memref<8x32xf32, #tpu.memory_space<vmem>> -> memref<1x32xf32, #tpu.memory_space<vmem>>
    tpu.enqueue_dma source(%29 : memref<1x32xf32, #tpu.memory_space<any>>) target(%30 : memref<1x32xf32, #tpu.memory_space<vmem>>) target_semaphore(%arg8 : memref<!tpu.dma_semaphore, #tpu.memory_space<semaphore_mem>>)
    %c6_i32 = arith.constant 6 : i32
    %31 = arith.addi %0, %c6_i32 : i32
    %32 = arith.index_cast %31 : i32 to index
    %33 = memref.load %arg1[%32] : memref<8xi32, #tpu.memory_space<smem>>
    %c0_i32_18 = arith.constant 0 : i32
    %34 = tpu.memref_slice %arg4[%33, %c0_i32_18] : memref<64x32xf32, #tpu.memory_space<any>> -> memref<1x32xf32, #tpu.memory_space<any>>
    %c6_i32_19 = arith.constant 6 : i32
    %c0_i32_20 = arith.constant 0 : i32
    %35 = tpu.memref_slice %arg7[%c6_i32_19, %c0_i32_20] : memref<8x32xf32, #tpu.memory_space<vmem>> -> memref<1x32xf32, #tpu.memory_space<vmem>>
    tpu.enqueue_dma source(%34 : memref<1x32xf32, #tpu.memory_space<any>>) target(%35 : memref<1x32xf32, #tpu.memory_space<vmem>>) target_semaphore(%arg8 : memref<!tpu.dma_semaphore, #tpu.memory_space<semaphore_mem>>)
    %c7_i32 = arith.constant 7 : i32
    %36 = arith.addi %0, %c7_i32 : i32
    %37 = arith.index_cast %36 : i32 to index
    %38 = memref.load %arg1[%37] : memref<8xi32, #tpu.memory_space<smem>>
    %c0_i32_21 = arith.constant 0 : i32
    %39 = tpu.memref_slice %arg4[%38, %c0_i32_21] : memref<64x32xf32, #tpu.memory_space<any>> -> memref<1x32xf32, #tpu.memory_space<any>>
    %c7_i32_22 = arith.constant 7 : i32
    %c0_i32_23 = arith.constant 0 : i32
    %40 = tpu.memref_slice %arg7[%c7_i32_22, %c0_i32_23] : memref<8x32xf32, #tpu.memory_space<vmem>> -> memref<1x32xf32, #tpu.memory_space<vmem>>
    tpu.enqueue_dma source(%39 : memref<1x32xf32, #tpu.memory_space<any>>) target(%40 : memref<1x32xf32, #tpu.memory_space<vmem>>) target_semaphore(%arg8 : memref<!tpu.dma_semaphore, #tpu.memory_space<semaphore_mem>>)
    %c0 = arith.constant 0 : index
    %c0_24 = arith.constant 0 : index
    %41 = vector.load %arg2[%c0, %c0_24] : memref<8x32xf32, #tpu.memory_space<vmem>>, vector<8x32xf32>
    %c0_25 = arith.constant 0 : index
    %c0_26 = arith.constant 0 : index
    %42 = vector.load %arg3[%c0_25, %c0_26] : memref<8x1xi32, #tpu.memory_space<vmem>>, vector<8x1xi32>
    %43 = tpu.iota {dimensions = array<i32: 1>} : vector<8x32xi32>
    %44 = vector.broadcast %42 : vector<8x1xi32> to vector<8x32xi32>
    %45 = arith.cmpi eq, %43, %44 : vector<8x32xi32>
    %cst = arith.constant dense<0xFF800000> : vector<8xf32>
    %46 = vector.multi_reduction <maximumf>, %41, %cst [1] : vector<8x32xf32> to vector<8xf32>
    %47 = vector.shape_cast %46 : vector<8xf32> to vector<8x1xf32>
    %48 = vector.broadcast %47 : vector<8x1xf32> to vector<8x32xf32>
    %49 = arith.subf %41, %48 : vector<8x32xf32>
    %50 = math.exp %49 : vector<8x32xf32>
    %cst_27 = arith.constant dense<0.000000e+00> : vector<8xf32>
    %51 = vector.multi_reduction <add>, %50, %cst_27 [1] : vector<8x32xf32> to vector<8xf32>
    %52 = vector.shape_cast %51 : vector<8xf32> to vector<8x1xf32>
    %53 = math.log %52 : vector<8x1xf32>
    %54 = vector.broadcast %53 : vector<8x1xf32> to vector<8x32xf32>
    %55 = arith.subf %49, %54 : vector<8x32xf32>
    %cst_28 = arith.constant 0.000000e+00 : f32
    %56 = vector.broadcast %cst_28 : f32 to vector<8x32xf32>
    %57 = arith.select %45, %55, %56 : vector<8x32xi1>, vector<8x32xf32>
    %cst_29 = arith.constant dense<0.000000e+00> : vector<8xf32>
    %58 = vector.multi_reduction <add>, %57, %cst_29 [1] : vector<8x32xf32> to vector<8xf32>
    %59 = vector.shape_cast %58 : vector<8xf32> to vector<8x1xf32>
    %cst_30 = arith.constant dense<0.000000e+00> : vector<8xf32>
    %60 = vector.multi_reduction <add>, %55, %cst_30 [1] : vector<8x32xf32> to vector<8xf32>
    %61 = vector.shape_cast %60 : vector<8xf32> to vector<8x1xf32>
    %cst_31 = arith.constant 5.000000e-01 : f32
    %62 = vector.broadcast %cst_31 : f32 to vector<8x1xf32>
    %63 = arith.mulf %62, %59 : vector<8x1xf32>
    %cst_32 = arith.constant 1.562500e-02 : f32
    %64 = vector.broadcast %cst_32 : f32 to vector<8x1xf32>
    %65 = arith.mulf %64, %61 : vector<8x1xf32>
    %66 = arith.addf %63, %65 : vector<8x1xf32>
    %c0_i32_33 = arith.constant 0 : i32
    %67 = arith.cmpi eq, %arg0, %c0_i32_33 : i32
    %68 = arith.extui %67 : i1 to i32
    %c0_i32_34 = arith.constant 0 : i32
    %69 = arith.cmpi ne, %68, %c0_i32_34 : i32
    scf.if %69 {
      %cst_145 = arith.constant 0.000000e+00 : f32
      %161 = vector.broadcast %cst_145 : f32 to vector<1x1xf32>
      %c0_146 = arith.constant 0 : index
      %c0_147 = arith.constant 0 : index
      %162 = vector.load %arg6[%c0_146, %c0_147] : memref<1x1xf32, #tpu.memory_space<vmem>>, vector<1x1xf32>
      tpu.vector_store %arg6[%c0_146, %c0_147], %161 {strides = array<i32>} : memref<1x1xf32, #tpu.memory_space<vmem>>, vector<1x1xf32>,
    } else {
    }
    %c0_35 = arith.constant 0 : index
    %c0_36 = arith.constant 0 : index
    %70 = vector.load %arg6[%c0_35, %c0_36] : memref<1x1xf32, #tpu.memory_space<vmem>>, vector<1x1xf32>
    %71 = vector.shape_cast %66 : vector<8x1xf32> to vector<1x8x1xf32>
    %cst_37 = arith.constant dense<0.000000e+00> : vector<1xf32>
    %72 = vector.multi_reduction <add>, %71, %cst_37 [1, 2] : vector<1x8x1xf32> to vector<1xf32>
    %73 = vector.shape_cast %72 : vector<1xf32> to vector<1x1x1xf32>
    %74 = vector.extract %73[0, 0, 0] : f32 from vector<1x1x1xf32>
    %cst_38 = arith.constant 0.000000e+00 : f32
    %75 = arith.subf %cst_38, %74 : f32
    %76 = vector.broadcast %75 : f32 to vector<1x1xf32>
    %77 = arith.addf %70, %76 : vector<1x1xf32>
    %c0_39 = arith.constant 0 : index
    %c0_40 = arith.constant 0 : index
    %78 = vector.load %arg6[%c0_39, %c0_40] : memref<1x1xf32, #tpu.memory_space<vmem>>, vector<1x1xf32>
    tpu.vector_store %arg6[%c0_39, %c0_40], %77 {strides = array<i32>} : memref<1x1xf32, #tpu.memory_space<vmem>>, vector<1x1xf32>,
    %c0_i32_41 = arith.constant 0 : i32
    %79 = arith.cmpi eq, %arg0, %c0_i32_41 : i32
    %80 = arith.extui %79 : i1 to i32
    %c0_i32_42 = arith.constant 0 : i32
    %81 = arith.cmpi ne, %80, %c0_i32_42 : i32
    scf.if %81 {
      %c0_145 = arith.constant 0 : index
      %c0_146 = arith.constant 0 : index
      %161 = vector.load %arg6[%c0_145, %c0_146] : memref<1x1xf32, #tpu.memory_space<vmem>>, vector<1x1xf32>
      %cst_147 = arith.constant 1.250000e-01 : f32
      %162 = vector.broadcast %cst_147 : f32 to vector<1x1xf32>
      %163 = arith.mulf %161, %162 : vector<1x1xf32>
      %c0_148 = arith.constant 0 : index
      %c0_149 = arith.constant 0 : index
      %164 = vector.load %arg6[%c0_148, %c0_149] : memref<1x1xf32, #tpu.memory_space<vmem>>, vector<1x1xf32>
      tpu.vector_store %arg6[%c0_148, %c0_149], %163 {strides = array<i32>} : memref<1x1xf32, #tpu.memory_space<vmem>>, vector<1x1xf32>,
    } else {
    }
    %c0_i32_43 = arith.constant 0 : i32
    %c0_i32_44 = arith.constant 0 : i32
    %82 = tpu.memref_slice %arg4[%c0_i32_43, %c0_i32_44] : memref<64x32xf32, #tpu.memory_space<any>> -> memref<1x32xf32, #tpu.memory_space<any>>
    %c0_i32_45 = arith.constant 0 : i32
    %c0_i32_46 = arith.constant 0 : i32
    %83 = tpu.memref_slice %arg7[%c0_i32_45, %c0_i32_46] : memref<8x32xf32, #tpu.memory_space<vmem>> -> memref<1x32xf32, #tpu.memory_space<vmem>>
    tpu.wait_dma2 semaphore(%arg8 : memref<!tpu.dma_semaphore, #tpu.memory_space<semaphore_mem>>) src(%82 : memref<1x32xf32, #tpu.memory_space<any>>) dst(%83 : memref<1x32xf32, #tpu.memory_space<vmem>>)
    %c0_i32_47 = arith.constant 0 : i32
    %c0_i32_48 = arith.constant 0 : i32
    %84 = tpu.memref_slice %arg4[%c0_i32_47, %c0_i32_48] : memref<64x32xf32, #tpu.memory_space<any>> -> memref<1x32xf32, #tpu.memory_space<any>>
    %c1_i32_49 = arith.constant 1 : i32
    %c0_i32_50 = arith.constant 0 : i32
    %85 = tpu.memref_slice %arg7[%c1_i32_49, %c0_i32_50] : memref<8x32xf32, #tpu.memory_space<vmem>> -> memref<1x32xf32, #tpu.memory_space<vmem>>
    tpu.wait_dma2 semaphore(%arg8 : memref<!tpu.dma_semaphore, #tpu.memory_space<semaphore_mem>>) src(%84 : memref<1x32xf32, #tpu.memory_space<any>>) dst(%85 : memref<1x32xf32, #tpu.memory_space<vmem>>)
    %c0_i32_51 = arith.constant 0 : i32
    %c0_i32_52 = arith.constant 0 : i32
    %86 = tpu.memref_slice %arg4[%c0_i32_51, %c0_i32_52] : memref<64x32xf32, #tpu.memory_space<any>> -> memref<1x32xf32, #tpu.memory_space<any>>
    %c2_i32_53 = arith.constant 2 : i32
    %c0_i32_54 = arith.constant 0 : i32
    %87 = tpu.memref_slice %arg7[%c2_i32_53, %c0_i32_54] : memref<8x32xf32, #tpu.memory_space<vmem>> -> memref<1x32xf32, #tpu.memory_space<vmem>>
    tpu.wait_dma2 semaphore(%arg8 : memref<!tpu.dma_semaphore, #tpu.memory_space<semaphore_mem>>) src(%86 : memref<1x32xf32, #tpu.memory_space<any>>) dst(%87 : memref<1x32xf32, #tpu.memory_space<vmem>>)
    %c0_i32_55 = arith.constant 0 : i32
    %c0_i32_56 = arith.constant 0 : i32
    %88 = tpu.memref_slice %arg4[%c0_i32_55, %c0_i32_56] : memref<64x32xf32, #tpu.memory_space<any>> -> memref<1x32xf32, #tpu.memory_space<any>>
    %c3_i32_57 = arith.constant 3 : i32
    %c0_i32_58 = arith.constant 0 : i32
    %89 = tpu.memref_slice %arg7[%c3_i32_57, %c0_i32_58] : memref<8x32xf32, #tpu.memory_space<vmem>> -> memref<1x32xf32, #tpu.memory_space<vmem>>
    tpu.wait_dma2 semaphore(%arg8 : memref<!tpu.dma_semaphore, #tpu.memory_space<semaphore_mem>>) src(%88 : memref<1x32xf32, #tpu.memory_space<any>>) dst(%89 : memref<1x32xf32, #tpu.memory_space<vmem>>)
    %c0_i32_59 = arith.constant 0 : i32
    %c0_i32_60 = arith.constant 0 : i32
    %90 = tpu.memref_slice %arg4[%c0_i32_59, %c0_i32_60] : memref<64x32xf32, #tpu.memory_space<any>> -> memref<1x32xf32, #tpu.memory_space<any>>
    %c4_i32_61 = arith.constant 4 : i32
    %c0_i32_62 = arith.constant 0 : i32
    %91 = tpu.memref_slice %arg7[%c4_i32_61, %c0_i32_62] : memref<8x32xf32, #tpu.memory_space<vmem>> -> memref<1x32xf32, #tpu.memory_space<vmem>>
    tpu.wait_dma2 semaphore(%arg8 : memref<!tpu.dma_semaphore, #tpu.memory_space<semaphore_mem>>) src(%90 : memref<1x32xf32, #tpu.memory_space<any>>) dst(%91 : memref<1x32xf32, #tpu.memory_space<vmem>>)
    %c0_i32_63 = arith.constant 0 : i32
    %c0_i32_64 = arith.constant 0 : i32
    %92 = tpu.memref_slice %arg4[%c0_i32_63, %c0_i32_64] : memref<64x32xf32, #tpu.memory_space<any>> -> memref<1x32xf32, #tpu.memory_space<any>>
    %c5_i32_65 = arith.constant 5 : i32
    %c0_i32_66 = arith.constant 0 : i32
    %93 = tpu.memref_slice %arg7[%c5_i32_65, %c0_i32_66] : memref<8x32xf32, #tpu.memory_space<vmem>> -> memref<1x32xf32, #tpu.memory_space<vmem>>
    tpu.wait_dma2 semaphore(%arg8 : memref<!tpu.dma_semaphore, #tpu.memory_space<semaphore_mem>>) src(%92 : memref<1x32xf32, #tpu.memory_space<any>>) dst(%93 : memref<1x32xf32, #tpu.memory_space<vmem>>)
    %c0_i32_67 = arith.constant 0 : i32
    %c0_i32_68 = arith.constant 0 : i32
    %94 = tpu.memref_slice %arg4[%c0_i32_67, %c0_i32_68] : memref<64x32xf32, #tpu.memory_space<any>> -> memref<1x32xf32, #tpu.memory_space<any>>
    %c6_i32_69 = arith.constant 6 : i32
    %c0_i32_70 = arith.constant 0 : i32
    %95 = tpu.memref_slice %arg7[%c6_i32_69, %c0_i32_70] : memref<8x32xf32, #tpu.memory_space<vmem>> -> memref<1x32xf32, #tpu.memory_space<vmem>>
    tpu.wait_dma2 semaphore(%arg8 : memref<!tpu.dma_semaphore, #tpu.memory_space<semaphore_mem>>) src(%94 : memref<1x32xf32, #tpu.memory_space<any>>) dst(%95 : memref<1x32xf32, #tpu.memory_space<vmem>>)
    %c0_i32_71 = arith.constant 0 : i32
    %c0_i32_72 = arith.constant 0 : i32
    %96 = tpu.memref_slice %arg4[%c0_i32_71, %c0_i32_72] : memref<64x32xf32, #tpu.memory_space<any>> -> memref<1x32xf32, #tpu.memory_space<any>>
    %c7_i32_73 = arith.constant 7 : i32
    %c0_i32_74 = arith.constant 0 : i32
    %97 = tpu.memref_slice %arg7[%c7_i32_73, %c0_i32_74] : memref<8x32xf32, #tpu.memory_space<vmem>> -> memref<1x32xf32, #tpu.memory_space<vmem>>
    tpu.wait_dma2 semaphore(%arg8 : memref<!tpu.dma_semaphore, #tpu.memory_space<semaphore_mem>>) src(%96 : memref<1x32xf32, #tpu.memory_space<any>>) dst(%97 : memref<1x32xf32, #tpu.memory_space<vmem>>)
    %c0_75 = arith.constant 0 : index
    %c0_76 = arith.constant 0 : index
    %98 = vector.load %arg7[%c0_75, %c0_76] : memref<8x32xf32, #tpu.memory_space<vmem>>, vector<8x32xf32>
    %cst_77 = arith.constant 0.699999988 : f32
    %99 = vector.broadcast %cst_77 : f32 to vector<8x32xf32>
    %100 = arith.mulf %99, %98 : vector<8x32xf32>
    %cst_78 = arith.constant 3.000000e-01 : f32
    %101 = vector.broadcast %cst_78 : f32 to vector<8x32xf32>
    %102 = arith.mulf %101, %41 : vector<8x32xf32>
    %103 = arith.addf %100, %102 : vector<8x32xf32>
    %c0_79 = arith.constant 0 : index
    %c0_80 = arith.constant 0 : index
    %104 = vector.load %arg7[%c0_79, %c0_80] : memref<8x32xf32, #tpu.memory_space<vmem>>, vector<8x32xf32>
    tpu.vector_store %arg7[%c0_79, %c0_80], %103 {strides = array<i32>} : memref<8x32xf32, #tpu.memory_space<vmem>>, vector<8x32xf32>,
    %c0_i32_81 = arith.constant 0 : i32
    %105 = arith.addi %0, %c0_i32_81 : i32
    %106 = arith.index_cast %105 : i32 to index
    %107 = memref.load %arg1[%106] : memref<8xi32, #tpu.memory_space<smem>>
    %c0_i32_82 = arith.constant 0 : i32
    %c0_i32_83 = arith.constant 0 : i32
    %108 = tpu.memref_slice %arg7[%c0_i32_82, %c0_i32_83] : memref<8x32xf32, #tpu.memory_space<vmem>> -> memref<1x32xf32, #tpu.memory_space<vmem>>
    %c0_i32_84 = arith.constant 0 : i32
    %109 = tpu.memref_slice %arg5[%107, %c0_i32_84] : memref<64x32xf32, #tpu.memory_space<any>> -> memref<1x32xf32, #tpu.memory_space<any>>
    tpu.enqueue_dma source(%108 : memref<1x32xf32, #tpu.memory_space<vmem>>) target(%109 : memref<1x32xf32, #tpu.memory_space<any>>) target_semaphore(%arg8 : memref<!tpu.dma_semaphore, #tpu.memory_space<semaphore_mem>>)
    %c1_i32_85 = arith.constant 1 : i32
    %110 = arith.addi %0, %c1_i32_85 : i32
    %111 = arith.index_cast %110 : i32 to index
    %112 = memref.load %arg1[%111] : memref<8xi32, #tpu.memory_space<smem>>
    %c1_i32_86 = arith.constant 1 : i32
    %c0_i32_87 = arith.constant 0 : i32
    %113 = tpu.memref_slice %arg7[%c1_i32_86, %c0_i32_87] : memref<8x32xf32, #tpu.memory_space<vmem>> -> memref<1x32xf32, #tpu.memory_space<vmem>>
    %c0_i32_88 = arith.constant 0 : i32
    %114 = tpu.memref_slice %arg5[%112, %c0_i32_88] : memref<64x32xf32, #tpu.memory_space<any>> -> memref<1x32xf32, #tpu.memory_space<any>>
    tpu.enqueue_dma source(%113 : memref<1x32xf32, #tpu.memory_space<vmem>>) target(%114 : memref<1x32xf32, #tpu.memory_space<any>>) target_semaphore(%arg8 : memref<!tpu.dma_semaphore, #tpu.memory_space<semaphore_mem>>)
    %c2_i32_89 = arith.constant 2 : i32
    %115 = arith.addi %0, %c2_i32_89 : i32
    %116 = arith.index_cast %115 : i32 to index
    %117 = memref.load %arg1[%116] : memref<8xi32, #tpu.memory_space<smem>>
    %c2_i32_90 = arith.constant 2 : i32
    %c0_i32_91 = arith.constant 0 : i32
    %118 = tpu.memref_slice %arg7[%c2_i32_90, %c0_i32_91] : memref<8x32xf32, #tpu.memory_space<vmem>> -> memref<1x32xf32, #tpu.memory_space<vmem>>
    %c0_i32_92 = arith.constant 0 : i32
    %119 = tpu.memref_slice %arg5[%117, %c0_i32_92] : memref<64x32xf32, #tpu.memory_space<any>> -> memref<1x32xf32, #tpu.memory_space<any>>
    tpu.enqueue_dma source(%118 : memref<1x32xf32, #tpu.memory_space<vmem>>) target(%119 : memref<1x32xf32, #tpu.memory_space<any>>) target_semaphore(%arg8 : memref<!tpu.dma_semaphore, #tpu.memory_space<semaphore_mem>>)
    %c3_i32_93 = arith.constant 3 : i32
    %120 = arith.addi %0, %c3_i32_93 : i32
    %121 = arith.index_cast %120 : i32 to index
    %122 = memref.load %arg1[%121] : memref<8xi32, #tpu.memory_space<smem>>
    %c3_i32_94 = arith.constant 3 : i32
    %c0_i32_95 = arith.constant 0 : i32
    %123 = tpu.memref_slice %arg7[%c3_i32_94, %c0_i32_95] : memref<8x32xf32, #tpu.memory_space<vmem>> -> memref<1x32xf32, #tpu.memory_space<vmem>>
    %c0_i32_96 = arith.constant 0 : i32
    %124 = tpu.memref_slice %arg5[%122, %c0_i32_96] : memref<64x32xf32, #tpu.memory_space<any>> -> memref<1x32xf32, #tpu.memory_space<any>>
    tpu.enqueue_dma source(%123 : memref<1x32xf32, #tpu.memory_space<vmem>>) target(%124 : memref<1x32xf32, #tpu.memory_space<any>>) target_semaphore(%arg8 : memref<!tpu.dma_semaphore, #tpu.memory_space<semaphore_mem>>)
    %c4_i32_97 = arith.constant 4 : i32
    %125 = arith.addi %0, %c4_i32_97 : i32
    %126 = arith.index_cast %125 : i32 to index
    %127 = memref.load %arg1[%126] : memref<8xi32, #tpu.memory_space<smem>>
    %c4_i32_98 = arith.constant 4 : i32
    %c0_i32_99 = arith.constant 0 : i32
    %128 = tpu.memref_slice %arg7[%c4_i32_98, %c0_i32_99] : memref<8x32xf32, #tpu.memory_space<vmem>> -> memref<1x32xf32, #tpu.memory_space<vmem>>
    %c0_i32_100 = arith.constant 0 : i32
    %129 = tpu.memref_slice %arg5[%127, %c0_i32_100] : memref<64x32xf32, #tpu.memory_space<any>> -> memref<1x32xf32, #tpu.memory_space<any>>
    tpu.enqueue_dma source(%128 : memref<1x32xf32, #tpu.memory_space<vmem>>) target(%129 : memref<1x32xf32, #tpu.memory_space<any>>) target_semaphore(%arg8 : memref<!tpu.dma_semaphore, #tpu.memory_space<semaphore_mem>>)
    %c5_i32_101 = arith.constant 5 : i32
    %130 = arith.addi %0, %c5_i32_101 : i32
    %131 = arith.index_cast %130 : i32 to index
    %132 = memref.load %arg1[%131] : memref<8xi32, #tpu.memory_space<smem>>
    %c5_i32_102 = arith.constant 5 : i32
    %c0_i32_103 = arith.constant 0 : i32
    %133 = tpu.memref_slice %arg7[%c5_i32_102, %c0_i32_103] : memref<8x32xf32, #tpu.memory_space<vmem>> -> memref<1x32xf32, #tpu.memory_space<vmem>>
    %c0_i32_104 = arith.constant 0 : i32
    %134 = tpu.memref_slice %arg5[%132, %c0_i32_104] : memref<64x32xf32, #tpu.memory_space<any>> -> memref<1x32xf32, #tpu.memory_space<any>>
    tpu.enqueue_dma source(%133 : memref<1x32xf32, #tpu.memory_space<vmem>>) target(%134 : memref<1x32xf32, #tpu.memory_space<any>>) target_semaphore(%arg8 : memref<!tpu.dma_semaphore, #tpu.memory_space<semaphore_mem>>)
    %c6_i32_105 = arith.constant 6 : i32
    %135 = arith.addi %0, %c6_i32_105 : i32
    %136 = arith.index_cast %135 : i32 to index
    %137 = memref.load %arg1[%136] : memref<8xi32, #tpu.memory_space<smem>>
    %c6_i32_106 = arith.constant 6 : i32
    %c0_i32_107 = arith.constant 0 : i32
    %138 = tpu.memref_slice %arg7[%c6_i32_106, %c0_i32_107] : memref<8x32xf32, #tpu.memory_space<vmem>> -> memref<1x32xf32, #tpu.memory_space<vmem>>
    %c0_i32_108 = arith.constant 0 : i32
    %139 = tpu.memref_slice %arg5[%137, %c0_i32_108] : memref<64x32xf32, #tpu.memory_space<any>> -> memref<1x32xf32, #tpu.memory_space<any>>
    tpu.enqueue_dma source(%138 : memref<1x32xf32, #tpu.memory_space<vmem>>) target(%139 : memref<1x32xf32, #tpu.memory_space<any>>) target_semaphore(%arg8 : memref<!tpu.dma_semaphore, #tpu.memory_space<semaphore_mem>>)
    %c7_i32_109 = arith.constant 7 : i32
    %140 = arith.addi %0, %c7_i32_109 : i32
    %141 = arith.index_cast %140 : i32 to index
    %142 = memref.load %arg1[%141] : memref<8xi32, #tpu.memory_space<smem>>
    %c7_i32_110 = arith.constant 7 : i32
    %c0_i32_111 = arith.constant 0 : i32
    %143 = tpu.memref_slice %arg7[%c7_i32_110, %c0_i32_111] : memref<8x32xf32, #tpu.memory_space<vmem>> -> memref<1x32xf32, #tpu.memory_space<vmem>>
    %c0_i32_112 = arith.constant 0 : i32
    %144 = tpu.memref_slice %arg5[%142, %c0_i32_112] : memref<64x32xf32, #tpu.memory_space<any>> -> memref<1x32xf32, #tpu.memory_space<any>>
    tpu.enqueue_dma source(%143 : memref<1x32xf32, #tpu.memory_space<vmem>>) target(%144 : memref<1x32xf32, #tpu.memory_space<any>>) target_semaphore(%arg8 : memref<!tpu.dma_semaphore, #tpu.memory_space<semaphore_mem>>)
    %c0_i32_113 = arith.constant 0 : i32
    %c0_i32_114 = arith.constant 0 : i32
    %145 = tpu.memref_slice %arg7[%c0_i32_113, %c0_i32_114] : memref<8x32xf32, #tpu.memory_space<vmem>> -> memref<1x32xf32, #tpu.memory_space<vmem>>
    %c0_i32_115 = arith.constant 0 : i32
    %c0_i32_116 = arith.constant 0 : i32
    %146 = tpu.memref_slice %arg5[%c0_i32_115, %c0_i32_116] : memref<64x32xf32, #tpu.memory_space<any>> -> memref<1x32xf32, #tpu.memory_space<any>>
    tpu.wait_dma2 semaphore(%arg8 : memref<!tpu.dma_semaphore, #tpu.memory_space<semaphore_mem>>) src(%145 : memref<1x32xf32, #tpu.memory_space<vmem>>) dst(%146 : memref<1x32xf32, #tpu.memory_space<any>>)
    %c1_i32_117 = arith.constant 1 : i32
    %c0_i32_118 = arith.constant 0 : i32
    %147 = tpu.memref_slice %arg7[%c1_i32_117, %c0_i32_118] : memref<8x32xf32, #tpu.memory_space<vmem>> -> memref<1x32xf32, #tpu.memory_space<vmem>>
    %c0_i32_119 = arith.constant 0 : i32
    %c0_i32_120 = arith.constant 0 : i32
    %148 = tpu.memref_slice %arg5[%c0_i32_119, %c0_i32_120] : memref<64x32xf32, #tpu.memory_space<any>> -> memref<1x32xf32, #tpu.memory_space<any>>
    tpu.wait_dma2 semaphore(%arg8 : memref<!tpu.dma_semaphore, #tpu.memory_space<semaphore_mem>>) src(%147 : memref<1x32xf32, #tpu.memory_space<vmem>>) dst(%148 : memref<1x32xf32, #tpu.memory_space<any>>)
    %c2_i32_121 = arith.constant 2 : i32
    %c0_i32_122 = arith.constant 0 : i32
    %149 = tpu.memref_slice %arg7[%c2_i32_121, %c0_i32_122] : memref<8x32xf32, #tpu.memory_space<vmem>> -> memref<1x32xf32, #tpu.memory_space<vmem>>
    %c0_i32_123 = arith.constant 0 : i32
    %c0_i32_124 = arith.constant 0 : i32
    %150 = tpu.memref_slice %arg5[%c0_i32_123, %c0_i32_124] : memref<64x32xf32, #tpu.memory_space<any>> -> memref<1x32xf32, #tpu.memory_space<any>>
    tpu.wait_dma2 semaphore(%arg8 : memref<!tpu.dma_semaphore, #tpu.memory_space<semaphore_mem>>) src(%149 : memref<1x32xf32, #tpu.memory_space<vmem>>) dst(%150 : memref<1x32xf32, #tpu.memory_space<any>>)
    %c3_i32_125 = arith.constant 3 : i32
    %c0_i32_126 = arith.constant 0 : i32
    %151 = tpu.memref_slice %arg7[%c3_i32_125, %c0_i32_126] : memref<8x32xf32, #tpu.memory_space<vmem>> -> memref<1x32xf32, #tpu.memory_space<vmem>>
    %c0_i32_127 = arith.constant 0 : i32
    %c0_i32_128 = arith.constant 0 : i32
    %152 = tpu.memref_slice %arg5[%c0_i32_127, %c0_i32_128] : memref<64x32xf32, #tpu.memory_space<any>> -> memref<1x32xf32, #tpu.memory_space<any>>
    tpu.wait_dma2 semaphore(%arg8 : memref<!tpu.dma_semaphore, #tpu.memory_space<semaphore_mem>>) src(%151 : memref<1x32xf32, #tpu.memory_space<vmem>>) dst(%152 : memref<1x32xf32, #tpu.memory_space<any>>)
    %c4_i32_129 = arith.constant 4 : i32
    %c0_i32_130 = arith.constant 0 : i32
    %153 = tpu.memref_slice %arg7[%c4_i32_129, %c0_i32_130] : memref<8x32xf32, #tpu.memory_space<vmem>> -> memref<1x32xf32, #tpu.memory_space<vmem>>
    %c0_i32_131 = arith.constant 0 : i32
    %c0_i32_132 = arith.constant 0 : i32
    %154 = tpu.memref_slice %arg5[%c0_i32_131, %c0_i32_132] : memref<64x32xf32, #tpu.memory_space<any>> -> memref<1x32xf32, #tpu.memory_space<any>>
    tpu.wait_dma2 semaphore(%arg8 : memref<!tpu.dma_semaphore, #tpu.memory_space<semaphore_mem>>) src(%153 : memref<1x32xf32, #tpu.memory_space<vmem>>) dst(%154 : memref<1x32xf32, #tpu.memory_space<any>>)
    %c5_i32_133 = arith.constant 5 : i32
    %c0_i32_134 = arith.constant 0 : i32
    %155 = tpu.memref_slice %arg7[%c5_i32_133, %c0_i32_134] : memref<8x32xf32, #tpu.memory_space<vmem>> -> memref<1x32xf32, #tpu.memory_space<vmem>>
    %c0_i32_135 = arith.constant 0 : i32
    %c0_i32_136 = arith.constant 0 : i32
    %156 = tpu.memref_slice %arg5[%c0_i32_135, %c0_i32_136] : memref<64x32xf32, #tpu.memory_space<any>> -> memref<1x32xf32, #tpu.memory_space<any>>
    tpu.wait_dma2 semaphore(%arg8 : memref<!tpu.dma_semaphore, #tpu.memory_space<semaphore_mem>>) src(%155 : memref<1x32xf32, #tpu.memory_space<vmem>>) dst(%156 : memref<1x32xf32, #tpu.memory_space<any>>)
    %c6_i32_137 = arith.constant 6 : i32
    %c0_i32_138 = arith.constant 0 : i32
    %157 = tpu.memref_slice %arg7[%c6_i32_137, %c0_i32_138] : memref<8x32xf32, #tpu.memory_space<vmem>> -> memref<1x32xf32, #tpu.memory_space<vmem>>
    %c0_i32_139 = arith.constant 0 : i32
    %c0_i32_140 = arith.constant 0 : i32
    %158 = tpu.memref_slice %arg5[%c0_i32_139, %c0_i32_140] : memref<64x32xf32, #tpu.memory_space<any>> -> memref<1x32xf32, #tpu.memory_space<any>>
    tpu.wait_dma2 semaphore(%arg8 : memref<!tpu.dma_semaphore, #tpu.memory_space<semaphore_mem>>) src(%157 : memref<1x32xf32, #tpu.memory_space<vmem>>) dst(%158 : memref<1x32xf32, #tpu.memory_space<any>>)
    %c7_i32_141 = arith.constant 7 : i32
    %c0_i32_142 = arith.constant 0 : i32
    %159 = tpu.memref_slice %arg7[%c7_i32_141, %c0_i32_142] : memref<8x32xf32, #tpu.memory_space<vmem>> -> memref<1x32xf32, #tpu.memory_space<vmem>>
    %c0_i32_143 = arith.constant 0 : i32
    %c0_i32_144 = arith.constant 0 : i32
    %160 = tpu.memref_slice %arg5[%c0_i32_143, %c0_i32_144] : memref<64x32xf32, #tpu.memory_space<any>> -> memref<1x32xf32, #tpu.memory_space<any>>
    tpu.wait_dma2 semaphore(%arg8 : memref<!tpu.dma_semaphore, #tpu.memory_space<semaphore_mem>>) src(%159 : memref<1x32xf32, #tpu.memory_space<vmem>>) dst(%160 : memref<1x32xf32, #tpu.memory_space<any>>)
    return
  }
  func.func @transform_0(%arg0: i32, %arg1: memref<8xi32, #tpu.memory_space<smem>>) -> (i32, i32) {
    %c0_i32 = arith.constant 0 : i32
    %c0_i32_0 = arith.constant 0 : i32
    return %arg0, %c0_i32 : i32, i32
  }
  func.func @transform_1(%arg0: i32, %arg1: memref<8xi32, #tpu.memory_space<smem>>) -> (i32, i32) {
    %c0_i32 = arith.constant 0 : i32
    %c0_i32_0 = arith.constant 0 : i32
    return %arg0, %c0_i32 : i32, i32
  }
  func.func @transform_4(%arg0: i32, %arg1: memref<8xi32, #tpu.memory_space<smem>>) -> (i32, i32) {
    %c0_i32 = arith.constant 0 : i32
    %c0_i32_0 = arith.constant 0 : i32
    %c0_i32_1 = arith.constant 0 : i32
    return %c0_i32, %c0_i32_0 : i32, i32
  }
}

</mosaic_0001>

<llo_original>
// kernel: ema_als_forward.1
$region0: #{ema_als_forward.1}
  #allocation0 [shape = 'u32[]', space=smem, size = 0x4, offset = 0x4, fixed_abs, tag = 'smem constant byte address 0x4 - core index']
  #allocation1 [shape = 'u32[144,128]{1,0:T(1,128)}', space=vmem, size = 0x12000, scoped, tag = 'internal scratch']
  #allocation2 [shape = 'f32[8,32]{1,0:T(8,128)}', space=vmem, size = 0x1000, scoped, tag = 'scratch operand']
  #allocation3 [shape = 's32[1]{0}', space=sflag, size = 0x4, scoped, tag = 'scratch operand']
  #allocation4 [shape = 's32[1]{0}', space=sflag, size = 0x4, scoped, tag = 'scoped memory for ema_als_forward.1']
  #allocation5 [shape = 'u8[512]{0}', space=smem, size = 0x200, scoped, tag = 'prefetched SMEM operand 0']
  #allocation8 [shape = 's32[]', space=sflag, size = 0x4, offset = 0, fixed_abs, tag = 'sflag constant byte address 0x0 - dummy sync flag']
  #allocation9 [shape = 's32[]', space=sflag, size = 0x4, offset = 0, fixed_abs, tag = 'sflag constant byte address 0x0 - dummy sync flag']
  #allocation10 [shape = 's32[]', space=sflag, size = 0x4, offset = 0, fixed_abs, tag = 'sflag constant byte address 0x0 - dummy sync flag']
  #allocation11 [shape = 's32[]', space=sflag, size = 0x4, offset = 0, fixed_abs, tag = 'sflag constant byte address 0x0 - dummy sync flag']
  #allocation12 [shape = 's32[]', space=sflag, size = 0x4, offset = 0, fixed_abs, tag = 'sflag constant byte address 0x0 - dummy sync flag']
  #allocation13 [shape = 's32[]', space=sflag, size = 0x4, offset = 0, fixed_abs, tag = 'sflag constant byte address 0x0 - dummy sync flag']
  #allocation14 [shape = 's32[]', space=sflag, size = 0x4, offset = 0, fixed_abs, tag = 'sflag constant byte address 0x0 - dummy sync flag']
  #allocation15 [shape = 's32[]', space=sflag, size = 0x4, offset = 0, fixed_abs, tag = 'sflag constant byte address 0x0 - dummy sync flag']
  #allocation16 [shape = 's32[]', space=sflag, size = 0x4, offset = 0, fixed_abs, tag = 'sflag constant byte address 0x0 - dummy sync flag']
  #allocation17 [shape = 's32[]', space=sflag, size = 0x4, offset = 0, fixed_abs, tag = 'sflag constant byte address 0x0 - dummy sync flag']
  #allocation18 [shape = 's32[]', space=sflag, size = 0x4, offset = 0, fixed_abs, tag = 'sflag constant byte address 0x0 - dummy sync flag']
  #allocation19 [shape = 's32[]', space=sflag, size = 0x4, offset = 0, fixed_abs, tag = 'sflag constant byte address 0x0 - dummy sync flag']
  #allocation20 [shape = 's32[]', space=sflag, size = 0x4, offset = 0, fixed_abs, tag = 'sflag constant byte address 0x0 - dummy sync flag']
  #allocation21 [shape = 's32[]', space=sflag, size = 0x4, offset = 0, fixed_abs, tag = 'sflag constant byte address 0x0 - dummy sync flag']
  #allocation22 [shape = 's32[]', space=sflag, size = 0x4, offset = 0, fixed_abs, tag = 'sflag constant byte address 0x0 - dummy sync flag']
  #allocation23 [shape = 's32[]', space=sflag, size = 0x4, offset = 0, fixed_abs, tag = 'sflag constant byte address 0x0 - dummy sync flag']
  %s0 = inlined_call_operand.vmem [shape: s32[8], index: 0, kind: input, shape index: {}]
  %s1 = inlined_call_operand.vmem [shape: f32[8,32], index: 1, kind: input, shape index: {}]
  %s2 = inlined_call_operand.vmem [shape: s32[8,1], index: 2, kind: input, shape index: {}]
  %s3 = inlined_call_operand.vmem [shape: f32[64,32], index: 3, kind: input, shape index: {}, may-alias: {3,4}]
  %s4 = inlined_call_operand.vmem [shape: f32[64,32], index: 4, kind: output, shape index: {0}, may-alias: {3,4}]
  %s5 = inlined_call_operand.hbm [shape: f32[1,1], index: 5, kind: output, shape index: {1}]
  %6 = xla_tuple %s4, %s5
  %s7 = sld [smem:[#allocation0]]
  $region506: #{ema_als_forward.1} parent=0
    _
  %s9 = ssub.s32 1, %s7
  %s10 = scalar_select 0, %s9, %s7
  %s11 = sshll.u32 %s0, 4
  %s12 = int_to_ptr.vmem [resolvable:$true] %s11
  %14 = dma.vmem_to_smem %s12, 16, [#allocation5], [#allocation4]
  %15 = dma.done [#allocation4], 16
  %16 = sfence
  $region1: #{ema_als_forward.1} parent=0
    #allocation6 [shape = 'u8[512]{0}', space=vmem, size = 0x400, scoped, tag = 'output window, operand 1, single buffered']
    #allocation7 [shape = 's32[1]{0}', space=sflag, size = 0x4, scoped, tag = 'scoped memory for ema_als_forward.1']
    %17 = vsyncpa [#allocation7], 0
    // Predicated region
    $region2: #{ema_als_forward.1} parent=1 // pred_check
      _
    $region3: #{ema_als_forward.1} parent=1 // pred_check_branch
      %19 = sbr.rel (0) target = $region5
    $region4: #{ema_als_forward.1} parent=1 // pred_region
      _
    $region5: #{ema_als_forward.1} parent=1 // pred_fallthru
      _
    // Predicated region
    $region6: #{ema_als_forward.1} parent=1 // pred_check
      _
    $region7: #{ema_als_forward.1} parent=1 // pred_check_branch
      %21 = sbr.rel (0) target = $region9
    $region8: #{ema_als_forward.1} parent=1 // pred_region
      _
    $region9: #{ema_als_forward.1} parent=1 // pred_fallthru
      _
    %s22 = smul.u32 0, 8
    %s23 = sld [smem:[#allocation5 + %s22]]
    %s24 = scalar_lea.vmem %s3, %s23
    %p26 = scmp.lt.u32.totalorder 1, 8
    %p27 = pneg %p26
    // Predicated region
    $region10: #{ema_als_forward.1} parent=1 // pred_check
      _
    $region11: #{ema_als_forward.1} parent=1 // pred_check_branch
      %29 = sbr.rel (%p26) target = $region13
    $region12: #{ema_als_forward.1} parent=1 // pred_region
      %s44 = sand.u32 1, 7
      %p45 = scmp.eq.s32.totalorder %s44, 0
      %p46 = pneg %p45
      // Predicated region
      $region25: #{ema_als_forward.1} parent=12 // pred_check
        _
      $region26: #{ema_als_forward.1} parent=12 // pred_check_branch
        %48 = sbr.rel (%p45) target = $region28
      $region27: #{ema_als_forward.1} parent=12 // pred_region
        %s49 = sand.u32 1, 7
        %s50 = ssub.s32 1, %s49
        %s51 = scalar_lea.vmem %s24, %s50
        %s52 = ssub.s32 1, %s49
        %s53 = scalar_lea.vmem [#allocation2], %s52
        %s54 = sshllo.u32 0, %s49
        loop: start=0, step=1, limit=1
        $region29: #{ema_als_forward.1} parent=27 // loop_pre_header
          _
        $region30: #{ema_als_forward.1} parent=27 // loop_header
          %s56 = sphi 0, %s60
          %p57 = scmp.ge.s32.totalorder %s56, 1
          %s61 = sphi %s51, %s51
          %s62 = sphi %s53, %s53
        $region31: #{ema_als_forward.1} parent=27 // loop_header_branch
          %59 = sbr.rel (%p57) target = $region35
        $region32: #{ema_als_forward.1} parent=27 // loop_body
          %v63 = vld [vmem:[%s61] sm:%s54]
          %64 = vst [vmem:[%s62] sm:%s54] %v63
        $region33: #{ema_als_forward.1} parent=27 // loop_footer
          %s60 = sadd.s32 1, %s56
        $region34: #{ema_als_forward.1} parent=27 // loop_footer_branch
          %55 = sbr.rel target = $region30
        $region35: #{ema_als_forward.1} parent=27 // loop_exit
          _
      $region28: #{ema_als_forward.1} parent=12 // pred_fallthru
        _
    $region13: #{ema_als_forward.1} parent=1 // pred_fallthru
      _
    // Predicated region
    $region14: #{ema_als_forward.1} parent=1 // pred_check
      %p30 = pneg %p26
    $region15: #{ema_als_forward.1} parent=1 // pred_check_branch
      %32 = sbr.rel (%p30) target = $region17
    $region16: #{ema_als_forward.1} parent=1 // pred_region
      %s33 = sshllo.u32 0, 1
      loop: start=0, step=1, limit=1
      $region18: #{ema_als_forward.1} parent=16 // loop_pre_header
        _
      $region19: #{ema_als_forward.1} parent=16 // loop_header
        %s35 = sphi 0, %s39
        %p36 = scmp.ge.s32.totalorder %s35, 1
        %s40 = sphi %s24, %s24
        %s41 = sphi [#allocation2], [#allocation2]
      $region20: #{ema_als_forward.1} parent=16 // loop_header_branch
        %38 = sbr.rel (%p36) target = $region24
      $region21: #{ema_als_forward.1} parent=16 // loop_body
        %v42 = vld [vmem:[%s40] sm:%s33]
        %43 = vst [vmem:[%s41] sm:%s33] %v42
      $region22: #{ema_als_forward.1} parent=16 // loop_footer
        %s39 = sadd.s32 1, %s35
      $region23: #{ema_als_forward.1} parent=16 // loop_footer_branch
        %34 = sbr.rel target = $region19
      $region24: #{ema_als_forward.1} parent=16 // loop_exit
        _
    $region17: #{ema_als_forward.1} parent=1 // pred_fallthru
      _
    // Predicated region
    $region36: #{ema_als_forward.1} parent=1 // pred_check
      _
    $region37: #{ema_als_forward.1} parent=1 // pred_check_branch
      %67 = sbr.rel (0) target = $region39
    $region38: #{ema_als_forward.1} parent=1 // pred_region
      %68 = vsyncadd [#allocation3], 16
    $region39: #{ema_als_forward.1} parent=1 // pred_fallthru
      _
    %s69 = sadd.s32 %s22, 1
    %s70 = sld [smem:[#allocation5 + %s69]]
    %s71 = scalar_lea.vmem %s3, %s70
    %s72 = scalar_lea.vmem [#allocation2], 1
    %p74 = scmp.lt.u32.totalorder 1, 8
    %p75 = pneg %p74
    // Predicated region
    $region40: #{ema_als_forward.1} parent=1 // pred_check
      _
    $region41: #{ema_als_forward.1} parent=1 // pred_check_branch
      %77 = sbr.rel (%p74) target = $region43
    $region42: #{ema_als_forward.1} parent=1 // pred_region
      %s92 = sand.u32 1, 7
      %p93 = scmp.eq.s32.totalorder %s92, 0
      %p94 = pneg %p93
      // Predicated region
      $region55: #{ema_als_forward.1} parent=42 // pred_check
        _
      $region56: #{ema_als_forward.1} parent=42 // pred_check_branch
        %96 = sbr.rel (%p93) target = $region58
      $region57: #{ema_als_forward.1} parent=42 // pred_region
        %s97 = sand.u32 1, 7
        %s98 = ssub.s32 1, %s97
        %s99 = scalar_lea.vmem %s71, %s98
        %s100 = ssub.s32 1, %s97
        %s101 = scalar_lea.vmem %s72, %s100 [#allocation2]
        %s102 = sshllo.u32 0, %s97
        loop: start=0, step=1, limit=1
        $region59: #{ema_als_forward.1} parent=57 // loop_pre_header
          _
        $region60: #{ema_als_forward.1} parent=57 // loop_header
          %s104 = sphi 0, %s108
          %p105 = scmp.ge.s32.totalorder %s104, 1
          %s109 = sphi %s99, %s99
          %s110 = sphi %s101, %s101
        $region61: #{ema_als_forward.1} parent=57 // loop_header_branch
          %107 = sbr.rel (%p105) target = $region65
        $region62: #{ema_als_forward.1} parent=57 // loop_body
          %v111 = vld [vmem:[%s109] sm:%s102]
          %112 = vst [vmem:[%s110] sm:%s102] %v111
        $region63: #{ema_als_forward.1} parent=57 // loop_footer
          %s108 = sadd.s32 1, %s104
        $region64: #{ema_als_forward.1} parent=57 // loop_footer_branch
          %103 = sbr.rel target = $region60
        $region65: #{ema_als_forward.1} parent=57 // loop_exit
          _
      $region58: #{ema_als_forward.1} parent=42 // pred_fallthru
        _
    $region43: #{ema_als_forward.1} parent=1 // pred_fallthru
      _
    // Predicated region
    $region44: #{ema_als_forward.1} parent=1 // pred_check
      %p78 = pneg %p74
    $region45: #{ema_als_forward.1} parent=1 // pred_check_branch
      %80 = sbr.rel (%p78) target = $region47
    $region46: #{ema_als_forward.1} parent=1 // pred_region
      %s81 = sshllo.u32 0, 1
      loop: start=0, step=1, limit=1
      $region48: #{ema_als_forward.1} parent=46 // loop_pre_header
        _
      $region49: #{ema_als_forward.1} parent=46 // loop_header
        %s83 = sphi 0, %s87
        %p84 = scmp.ge.s32.totalorder %s83, 1
        %s88 = sphi %s71, %s71
        %s89 = sphi %s72, %s72
      $region50: #{ema_als_forward.1} parent=46 // loop_header_branch
        %86 = sbr.rel (%p84) target = $region54
      $region51: #{ema_als_forward.1} parent=46 // loop_body
        %v90 = vld [vmem:[%s88] sm:%s81]
        %91 = vst [vmem:[%s89] sm:%s81] %v90
      $region52: #{ema_als_forward.1} parent=46 // loop_footer
        %s87 = sadd.s32 1, %s83
      $region53: #{ema_als_forward.1} parent=46 // loop_footer_branch
        %82 = sbr.rel target = $region49
      $region54: #{ema_als_forward.1} parent=46 // loop_exit
        _
    $region47: #{ema_als_forward.1} parent=1 // pred_fallthru
      _
    // Predicated region
    $region66: #{ema_als_forward.1} parent=1 // pred_check
      _
    $region67: #{ema_als_forward.1} parent=1 // pred_check_branch
      %115 = sbr.rel (0) target = $region69
    $region68: #{ema_als_forward.1} parent=1 // pred_region
      %116 = vsyncadd [#allocation3], 16
    $region69: #{ema_als_forward.1} parent=1 // pred_fallthru
      _
    %s117 = sadd.s32 %s22, 2
    %s118 = sld [smem:[#allocation5 + %s117]]
    %s119 = scalar_lea.vmem %s3, %s118
    %s120 = scalar_lea.vmem [#allocation2], 2
    %p122 = scmp.lt.u32.totalorder 1, 8
    %p123 = pneg %p122
    // Predicated region
    $region70: #{ema_als_forward.1} parent=1 // pred_check
      _
    $region71: #{ema_als_forward.1} parent=1 // pred_check_branch
      %125 = sbr.rel (%p122) target = $region73
    $region72: #{ema_als_forward.1} parent=1 // pred_region
      %s140 = sand.u32 1, 7
      %p141 = scmp.eq.s32.totalorder %s140, 0
      %p142 = pneg %p141
      // Predicated region
      $region85: #{ema_als_forward.1} parent=72 // pred_check
        _
      $region86: #{ema_als_forward.1} parent=72 // pred_check_branch
        %144 = sbr.rel (%p141) target = $region88
      $region87: #{ema_als_forward.1} parent=72 // pred_region
        %s145 = sand.u32 1, 7
        %s146 = ssub.s32 1, %s145
        %s147 = scalar_lea.vmem %s119, %s146
        %s148 = ssub.s32 1, %s145
        %s149 = scalar_lea.vmem %s120, %s148 [#allocation2]
        %s150 = sshllo.u32 0, %s145
        loop: start=0, step=1, limit=1
        $region89: #{ema_als_forward.1} parent=87 // loop_pre_header
          _
        $region90: #{ema_als_forward.1} parent=87 // loop_header
          %s152 = sphi 0, %s156
          %p153 = scmp.ge.s32.totalorder %s152, 1
          %s157 = sphi %s147, %s147
          %s158 = sphi %s149, %s149
        $region91: #{ema_als_forward.1} parent=87 // loop_header_branch
          %155 = sbr.rel (%p153) target = $region95
        $region92: #{ema_als_forward.1} parent=87 // loop_body
          %v159 = vld [vmem:[%s157] sm:%s150]
          %160 = vst [vmem:[%s158] sm:%s150] %v159
        $region93: #{ema_als_forward.1} parent=87 // loop_footer
          %s156 = sadd.s32 1, %s152
        $region94: #{ema_als_forward.1} parent=87 // loop_footer_branch
          %151 = sbr.rel target = $region90
        $region95: #{ema_als_forward.1} parent=87 // loop_exit
          _
      $region88: #{ema_als_forward.1} parent=72 // pred_fallthru
        _
    $region73: #{ema_als_forward.1} parent=1 // pred_fallthru
      _
    // Predicated region
    $region74: #{ema_als_forward.1} parent=1 // pred_check
      %p126 = pneg %p122
    $region75: #{ema_als_forward.1} parent=1 // pred_check_branch
      %128 = sbr.rel (%p126) target = $region77
    $region76: #{ema_als_forward.1} parent=1 // pred_region
      %s129 = sshllo.u32 0, 1
      loop: start=0, step=1, limit=1
      $region78: #{ema_als_forward.1} parent=76 // loop_pre_header
        _
      $region79: #{ema_als_forward.1} parent=76 // loop_header
        %s131 = sphi 0, %s135
        %p132 = scmp.ge.s32.totalorder %s131, 1
        %s136 = sphi %s119, %s119
        %s137 = sphi %s120, %s120
      $region80: #{ema_als_forward.1} parent=76 // loop_header_branch
        %134 = sbr.rel (%p132) target = $region84
      $region81: #{ema_als_forward.1} parent=76 // loop_body
        %v138 = vld [vmem:[%s136] sm:%s129]
        %139 = vst [vmem:[%s137] sm:%s129] %v138
      $region82: #{ema_als_forward.1} parent=76 // loop_footer
        %s135 = sadd.s32 1, %s131
      $region83: #{ema_als_forward.1} parent=76 // loop_footer_branch
        %130 = sbr.rel target = $region79
      $region84: #{ema_als_forward.1} parent=76 // loop_exit
        _
    $region77: #{ema_als_forward.1} parent=1 // pred_fallthru
      _
    // Predicated region
    $region96: #{ema_als_forward.1} parent=1 // pred_check
      _
    $region97: #{ema_als_forward.1} parent=1 // pred_check_branch
      %163 = sbr.rel (0) target = $region99
    $region98: #{ema_als_forward.1} parent=1 // pred_region
      %164 = vsyncadd [#allocation3], 16
    $region99: #{ema_als_forward.1} parent=1 // pred_fallthru
      _
    %s165 = sadd.s32 %s22, 3
    %s166 = sld [smem:[#allocation5 + %s165]]
    %s167 = scalar_lea.vmem %s3, %s166
    %s168 = scalar_lea.vmem [#allocation2], 3
    %p170 = scmp.lt.u32.totalorder 1, 8
    %p171 = pneg %p170
    // Predicated region
    $region100: #{ema_als_forward.1} parent=1 // pred_check
      _
    $region101: #{ema_als_forward.1} parent=1 // pred_check_branch
      %173 = sbr.rel (%p170) target = $region103
    $region102: #{ema_als_forward.1} parent=1 // pred_region
      %s188 = sand.u32 1, 7
      %p189 = scmp.eq.s32.totalorder %s188, 0
      %p190 = pneg %p189
      // Predicated region
      $region115: #{ema_als_forward.1} parent=102 // pred_check
        _
      $region116: #{ema_als_forward.1} parent=102 // pred_check_branch
        %192 = sbr.rel (%p189) target = $region118
      $region117: #{ema_als_forward.1} parent=102 // pred_region
        %s193 = sand.u32 1, 7
        %s194 = ssub.s32 1, %s193
        %s195 = scalar_lea.vmem %s167, %s194
        %s196 = ssub.s32 1, %s193
        %s197 = scalar_lea.vmem %s168, %s196 [#allocation2]
        %s198 = sshllo.u32 0, %s193
        loop: start=0, step=1, limit=1
        $region119: #{ema_als_forward.1} parent=117 // loop_pre_header
          _
        $region120: #{ema_als_forward.1} parent=117 // loop_header
          %s200 = sphi 0, %s204
          %p201 = scmp.ge.s32.totalorder %s200, 1
          %s205 = sphi %s195, %s195
          %s206 = sphi %s197, %s197
        $region121: #{ema_als_forward.1} parent=117 // loop_header_branch
          %203 = sbr.rel (%p201) target = $region125
        $region122: #{ema_als_forward.1} parent=117 // loop_body
          %v207 = vld [vmem:[%s205] sm:%s198]
          %208 = vst [vmem:[%s206] sm:%s198] %v207
        $region123: #{ema_als_forward.1} parent=117 // loop_footer
          %s204 = sadd.s32 1, %s200
        $region124: #{ema_als_forward.1} parent=117 // loop_footer_branch
          %199 = sbr.rel target = $region120
        $region125: #{ema_als_forward.1} parent=117 // loop_exit
          _
      $region118: #{ema_als_forward.1} parent=102 // pred_fallthru
        _
    $region103: #{ema_als_forward.1} parent=1 // pred_fallthru
      _
    // Predicated region
    $region104: #{ema_als_forward.1} parent=1 // pred_check
      %p174 = pneg %p170
    $region105: #{ema_als_forward.1} parent=1 // pred_check_branch
      %176 = sbr.rel (%p174) target = $region107
    $region106: #{ema_als_forward.1} parent=1 // pred_region
      %s177 = sshllo.u32 0, 1
      loop: start=0, step=1, limit=1
      $region108: #{ema_als_forward.1} parent=106 // loop_pre_header
        _
      $region109: #{ema_als_forward.1} parent=106 // loop_header
        %s179 = sphi 0, %s183
        %p180 = scmp.ge.s32.totalorder %s179, 1
        %s184 = sphi %s167, %s167
        %s185 = sphi %s168, %s168
      $region110: #{ema_als_forward.1} parent=106 // loop_header_branch
        %182 = sbr.rel (%p180) target = $region114
      $region111: #{ema_als_forward.1} parent=106 // loop_body
        %v186 = vld [vmem:[%s184] sm:%s177]
        %187 = vst [vmem:[%s185] sm:%s177] %v186
      $region112: #{ema_als_forward.1} parent=106 // loop_footer
        %s183 = sadd.s32 1, %s179
      $region113: #{ema_als_forward.1} parent=106 // loop_footer_branch
        %178 = sbr.rel target = $region109
      $region114: #{ema_als_forward.1} parent=106 // loop_exit
        _
    $region107: #{ema_als_forward.1} parent=1 // pred_fallthru
      _
    // Predicated region
    $region126: #{ema_als_forward.1} parent=1 // pred_check
      _
    $region127: #{ema_als_forward.1} parent=1 // pred_check_branch
      %211 = sbr.rel (0) target = $region129
    $region128: #{ema_als_forward.1} parent=1 // pred_region
      %212 = vsyncadd [#allocation3], 16
    $region129: #{ema_als_forward.1} parent=1 // pred_fallthru
      _
    %s213 = sadd.s32 %s22, 4
    %s214 = sld [smem:[#allocation5 + %s213]]
    %s215 = scalar_lea.vmem %s3, %s214
    %s216 = scalar_lea.vmem [#allocation2], 4
    %p218 = scmp.lt.u32.totalorder 1, 8
    %p219 = pneg %p218
    // Predicated region
    $region130: #{ema_als_forward.1} parent=1 // pred_check
      _
    $region131: #{ema_als_forward.1} parent=1 // pred_check_branch
      %221 = sbr.rel (%p218) target = $region133
    $region132: #{ema_als_forward.1} parent=1 // pred_region
      %s236 = sand.u32 1, 7
      %p237 = scmp.eq.s32.totalorder %s236, 0
      %p238 = pneg %p237
      // Predicated region
      $region145: #{ema_als_forward.1} parent=132 // pred_check
        _
      $region146: #{ema_als_forward.1} parent=132 // pred_check_branch
        %240 = sbr.rel (%p237) target = $region148
      $region147: #{ema_als_forward.1} parent=132 // pred_region
        %s241 = sand.u32 1, 7
        %s242 = ssub.s32 1, %s241
        %s243 = scalar_lea.vmem %s215, %s242
        %s244 = ssub.s32 1, %s241
        %s245 = scalar_lea.vmem %s216, %s244 [#allocation2]
        %s246 = sshllo.u32 0, %s241
        loop: start=0, step=1, limit=1
        $region149: #{ema_als_forward.1} parent=147 // loop_pre_header
          _
        $region150: #{ema_als_forward.1} parent=147 // loop_header
          %s248 = sphi 0, %s252
          %p249 = scmp.ge.s32.totalorder %s248, 1
          %s253 = sphi %s243, %s243
          %s254 = sphi %s245, %s245
        $region151: #{ema_als_forward.1} parent=147 // loop_header_branch
          %251 = sbr.rel (%p249) target = $region155
        $region152: #{ema_als_forward.1} parent=147 // loop_body
          %v255 = vld [vmem:[%s253] sm:%s246]
          %256 = vst [vmem:[%s254] sm:%s246] %v255
        $region153: #{ema_als_forward.1} parent=147 // loop_footer
          %s252 = sadd.s32 1, %s248
        $region154: #{ema_als_forward.1} parent=147 // loop_footer_branch
          %247 = sbr.rel target = $region150
        $region155: #{ema_als_forward.1} parent=147 // loop_exit
          _
      $region148: #{ema_als_forward.1} parent=132 // pred_fallthru
        _
    $region133: #{ema_als_forward.1} parent=1 // pred_fallthru
      _
    // Predicated region
    $region134: #{ema_als_forward.1} parent=1 // pred_check
      %p222 = pneg %p218
    $region135: #{ema_als_forward.1} parent=1 // pred_check_branch
      %224 = sbr.rel (%p222) target = $region137
    $region136: #{ema_als_forward.1} parent=1 // pred_region
      %s225 = sshllo.u32 0, 1
      loop: start=0, step=1, limit=1
      $region138: #{ema_als_forward.1} parent=136 // loop_pre_header
        _
      $region139: #{ema_als_forward.1} parent=136 // loop_header
        %s227 = sphi 0, %s231
        %p228 = scmp.ge.s32.totalorder %s227, 1
        %s232 = sphi %s215, %s215
        %s233 = sphi %s216, %s216
      $region140: #{ema_als_forward.1} parent=136 // loop_header_branch
        %230 = sbr.rel (%p228) target = $region144
      $region141: #{ema_als_forward.1} parent=136 // loop_body
        %v234 = vld [vmem:[%s232] sm:%s225]
        %235 = vst [vmem:[%s233] sm:%s225] %v234
      $region142: #{ema_als_forward.1} parent=136 // loop_footer
        %s231 = sadd.s32 1, %s227
      $region143: #{ema_als_forward.1} parent=136 // loop_footer_branch
        %226 = sbr.rel target = $region139
      $region144: #{ema_als_forward.1} parent=136 // loop_exit
        _
    $region137: #{ema_als_forward.1} parent=1 // pred_fallthru
      _
    // Predicated region
    $region156: #{ema_als_forward.1} parent=1 // pred_check
      _
    $region157: #{ema_als_forward.1} parent=1 // pred_check_branch
      %259 = sbr.rel (0) target = $region159
    $region158: #{ema_als_forward.1} parent=1 // pred_region
      %260 = vsyncadd [#allocation3], 16
    $region159: #{ema_als_forward.1} parent=1 // pred_fallthru
      _
    %s261 = sadd.s32 %s22, 5
    %s262 = sld [smem:[#allocation5 + %s261]]
    %s263 = scalar_lea.vmem %s3, %s262
    %s264 = scalar_lea.vmem [#allocation2], 5
    %p266 = scmp.lt.u32.totalorder 1, 8
    %p267 = pneg %p266
    // Predicated region
    $region160: #{ema_als_forward.1} parent=1 // pred_check
      _
    $region161: #{ema_als_forward.1} parent=1 // pred_check_branch
      %269 = sbr.rel (%p266) target = $region163
    $region162: #{ema_als_forward.1} parent=1 // pred_region
      %s284 = sand.u32 1, 7
      %p285 = scmp.eq.s32.totalorder %s284, 0
      %p286 = pneg %p285
      // Predicated region
      $region175: #{ema_als_forward.1} parent=162 // pred_check
        _
      $region176: #{ema_als_forward.1} parent=162 // pred_check_branch
        %288 = sbr.rel (%p285) target = $region178
      $region177: #{ema_als_forward.1} parent=162 // pred_region
        %s289 = sand.u32 1, 7
        %s290 = ssub.s32 1, %s289
        %s291 = scalar_lea.vmem %s263, %s290
        %s292 = ssub.s32 1, %s289
        %s293 = scalar_lea.vmem %s264, %s292 [#allocation2]
        %s294 = sshllo.u32 0, %s289
        loop: start=0, step=1, limit=1
        $region179: #{ema_als_forward.1} parent=177 // loop_pre_header
          _
        $region180: #{ema_als_forward.1} parent=177 // loop_header
          %s296 = sphi 0, %s300
          %p297 = scmp.ge.s32.totalorder %s296, 1
          %s301 = sphi %s291, %s291
          %s302 = sphi %s293, %s293
        $region181: #{ema_als_forward.1} parent=177 // loop_header_branch
          %299 = sbr.rel (%p297) target = $region185
        $region182: #{ema_als_forward.1} parent=177 // loop_body
          %v303 = vld [vmem:[%s301] sm:%s294]
          %304 = vst [vmem:[%s302] sm:%s294] %v303
        $region183: #{ema_als_forward.1} parent=177 // loop_footer
          %s300 = sadd.s32 1, %s296
        $region184: #{ema_als_forward.1} parent=177 // loop_footer_branch
          %295 = sbr.rel target = $region180
        $region185: #{ema_als_forward.1} parent=177 // loop_exit
          _
      $region178: #{ema_als_forward.1} parent=162 // pred_fallthru
        _
    $region163: #{ema_als_forward.1} parent=1 // pred_fallthru
      _
    // Predicated region
    $region164: #{ema_als_forward.1} parent=1 // pred_check
      %p270 = pneg %p266
    $region165: #{ema_als_forward.1} parent=1 // pred_check_branch
      %272 = sbr.rel (%p270) target = $region167
    $region166: #{ema_als_forward.1} parent=1 // pred_region
      %s273 = sshllo.u32 0, 1
      loop: start=0, step=1, limit=1
      $region168: #{ema_als_forward.1} parent=166 // loop_pre_header
        _
      $region169: #{ema_als_forward.1} parent=166 // loop_header
        %s275 = sphi 0, %s279
        %p276 = scmp.ge.s32.totalorder %s275, 1
        %s280 = sphi %s263, %s263
        %s281 = sphi %s264, %s264
      $region170: #{ema_als_forward.1} parent=166 // loop_header_branch
        %278 = sbr.rel (%p276) target = $region174
      $region171: #{ema_als_forward.1} parent=166 // loop_body
        %v282 = vld [vmem:[%s280] sm:%s273]
        %283 = vst [vmem:[%s281] sm:%s273] %v282
      $region172: #{ema_als_forward.1} parent=166 // loop_footer
        %s279 = sadd.s32 1, %s275
      $region173: #{ema_als_forward.1} parent=166 // loop_footer_branch
        %274 = sbr.rel target = $region169
      $region174: #{ema_als_forward.1} parent=166 // loop_exit
        _
    $region167: #{ema_als_forward.1} parent=1 // pred_fallthru
      _
    // Predicated region
    $region186: #{ema_als_forward.1} parent=1 // pred_check
      _
    $region187: #{ema_als_forward.1} parent=1 // pred_check_branch
      %307 = sbr.rel (0) target = $region189
    $region188: #{ema_als_forward.1} parent=1 // pred_region
      %308 = vsyncadd [#allocation3], 16
    $region189: #{ema_als_forward.1} parent=1 // pred_fallthru
      _
    %s309 = sadd.s32 %s22, 6
    %s310 = sld [smem:[#allocation5 + %s309]]
    %s311 = scalar_lea.vmem %s3, %s310
    %s312 = scalar_lea.vmem [#allocation2], 6
    %p314 = scmp.lt.u32.totalorder 1, 8
    %p315 = pneg %p314
    // Predicated region
    $region190: #{ema_als_forward.1} parent=1 // pred_check
      _
    $region191: #{ema_als_forward.1} parent=1 // pred_check_branch
      %317 = sbr.rel (%p314) target = $region193
    $region192: #{ema_als_forward.1} parent=1 // pred_region
      %s332 = sand.u32 1, 7
      %p333 = scmp.eq.s32.totalorder %s332, 0
      %p334 = pneg %p333
      // Predicated region
      $region205: #{ema_als_forward.1} parent=192 // pred_check
        _
      $region206: #{ema_als_forward.1} parent=192 // pred_check_branch
        %336 = sbr.rel (%p333) target = $region208
      $region207: #{ema_als_forward.1} parent=192 // pred_region
        %s337 = sand.u32 1, 7
        %s338 = ssub.s32 1, %s337
        %s339 = scalar_lea.vmem %s311, %s338
        %s340 = ssub.s32 1, %s337
        %s341 = scalar_lea.vmem %s312, %s340 [#allocation2]
        %s342 = sshllo.u32 0, %s337
        loop: start=0, step=1, limit=1
        $region209: #{ema_als_forward.1} parent=207 // loop_pre_header
          _
        $region210: #{ema_als_forward.1} parent=207 // loop_header
          %s344 = sphi 0, %s348
          %p345 = scmp.ge.s32.totalorder %s344, 1
          %s349 = sphi %s339, %s339
          %s350 = sphi %s341, %s341
        $region211: #{ema_als_forward.1} parent=207 // loop_header_branch
          %347 = sbr.rel (%p345) target = $region215
        $region212: #{ema_als_forward.1} parent=207 // loop_body
          %v351 = vld [vmem:[%s349] sm:%s342]
          %352 = vst [vmem:[%s350] sm:%s342] %v351
        $region213: #{ema_als_forward.1} parent=207 // loop_footer
          %s348 = sadd.s32 1, %s344
        $region214: #{ema_als_forward.1} parent=207 // loop_footer_branch
          %343 = sbr.rel target = $region210
        $region215: #{ema_als_forward.1} parent=207 // loop_exit
          _
      $region208: #{ema_als_forward.1} parent=192 // pred_fallthru
        _
    $region193: #{ema_als_forward.1} parent=1 // pred_fallthru
      _
    // Predicated region
    $region194: #{ema_als_forward.1} parent=1 // pred_check
      %p318 = pneg %p314
    $region195: #{ema_als_forward.1} parent=1 // pred_check_branch
      %320 = sbr.rel (%p318) target = $region197
    $region196: #{ema_als_forward.1} parent=1 // pred_region
      %s321 = sshllo.u32 0, 1
      loop: start=0, step=1, limit=1
      $region198: #{ema_als_forward.1} parent=196 // loop_pre_header
        _
      $region199: #{ema_als_forward.1} parent=196 // loop_header
        %s323 = sphi 0, %s327
        %p324 = scmp.ge.s32.totalorder %s323, 1
        %s328 = sphi %s311, %s311
        %s329 = sphi %s312, %s312
      $region200: #{ema_als_forward.1} parent=196 // loop_header_branch
        %326 = sbr.rel (%p324) target = $region204
      $region201: #{ema_als_forward.1} parent=196 // loop_body
        %v330 = vld [vmem:[%s328] sm:%s321]
        %331 = vst [vmem:[%s329] sm:%s321] %v330
      $region202: #{ema_als_forward.1} parent=196 // loop_footer
        %s327 = sadd.s32 1, %s323
      $region203: #{ema_als_forward.1} parent=196 // loop_footer_branch
        %322 = sbr.rel target = $region199
      $region204: #{ema_als_forward.1} parent=196 // loop_exit
        _
    $region197: #{ema_als_forward.1} parent=1 // pred_fallthru
      _
    // Predicated region
    $region216: #{ema_als_forward.1} parent=1 // pred_check
      _
    $region217: #{ema_als_forward.1} parent=1 // pred_check_branch
      %355 = sbr.rel (0) target = $region219
    $region218: #{ema_als_forward.1} parent=1 // pred_region
      %356 = vsyncadd [#allocation3], 16
    $region219: #{ema_als_forward.1} parent=1 // pred_fallthru
      _
    %s357 = sadd.s32 %s22, 7
    %s358 = sld [smem:[#allocation5 + %s357]]
    %s359 = scalar_lea.vmem %s3, %s358
    %s360 = scalar_lea.vmem [#allocation2], 7
    %p362 = scmp.lt.u32.totalorder 1, 8
    %p363 = pneg %p362
    // Predicated region
    $region220: #{ema_als_forward.1} parent=1 // pred_check
      _
    $region221: #{ema_als_forward.1} parent=1 // pred_check_branch
      %365 = sbr.rel (%p362) target = $region223
    $region222: #{ema_als_forward.1} parent=1 // pred_region
      %s380 = sand.u32 1, 7
      %p381 = scmp.eq.s32.totalorder %s380, 0
      %p382 = pneg %p381
      // Predicated region
      $region235: #{ema_als_forward.1} parent=222 // pred_check
        _
      $region236: #{ema_als_forward.1} parent=222 // pred_check_branch
        %384 = sbr.rel (%p381) target = $region238
      $region237: #{ema_als_forward.1} parent=222 // pred_region
        %s385 = sand.u32 1, 7
        %s386 = ssub.s32 1, %s385
        %s387 = scalar_lea.vmem %s359, %s386
        %s388 = ssub.s32 1, %s385
        %s389 = scalar_lea.vmem %s360, %s388 [#allocation2]
        %s390 = sshllo.u32 0, %s385
        loop: start=0, step=1, limit=1
        $region239: #{ema_als_forward.1} parent=237 // loop_pre_header
          _
        $region240: #{ema_als_forward.1} parent=237 // loop_header
          %s392 = sphi 0, %s396
          %p393 = scmp.ge.s32.totalorder %s392, 1
          %s397 = sphi %s387, %s387
          %s398 = sphi %s389, %s389
        $region241: #{ema_als_forward.1} parent=237 // loop_header_branch
          %395 = sbr.rel (%p393) target = $region245
        $region242: #{ema_als_forward.1} parent=237 // loop_body
          %v399 = vld [vmem:[%s397] sm:%s390]
          %400 = vst [vmem:[%s398] sm:%s390] %v399
        $region243: #{ema_als_forward.1} parent=237 // loop_footer
          %s396 = sadd.s32 1, %s392
        $region244: #{ema_als_forward.1} parent=237 // loop_footer_branch
          %391 = sbr.rel target = $region240
        $region245: #{ema_als_forward.1} parent=237 // loop_exit
          _
      $region238: #{ema_als_forward.1} parent=222 // pred_fallthru
        _
    $region223: #{ema_als_forward.1} parent=1 // pred_fallthru
      _
    // Predicated region
    $region224: #{ema_als_forward.1} parent=1 // pred_check
      %p366 = pneg %p362
    $region225: #{ema_als_forward.1} parent=1 // pred_check_branch
      %368 = sbr.rel (%p366) target = $region227
    $region226: #{ema_als_forward.1} parent=1 // pred_region
      %s369 = sshllo.u32 0, 1
      loop: start=0, step=1, limit=1
      $region228: #{ema_als_forward.1} parent=226 // loop_pre_header
        _
      $region229: #{ema_als_forward.1} parent=226 // loop_header
        %s371 = sphi 0, %s375
        %p372 = scmp.ge.s32.totalorder %s371, 1
        %s376 = sphi %s359, %s359
        %s377 = sphi %s360, %s360
      $region230: #{ema_als_forward.1} parent=226 // loop_header_branch
        %374 = sbr.rel (%p372) target = $region234
      $region231: #{ema_als_forward.1} parent=226 // loop_body
        %v378 = vld [vmem:[%s376] sm:%s369]
        %379 = vst [vmem:[%s377] sm:%s369] %v378
      $region232: #{ema_als_forward.1} parent=226 // loop_footer
        %s375 = sadd.s32 1, %s371
      $region233: #{ema_als_forward.1} parent=226 // loop_footer_branch
        %370 = sbr.rel target = $region229
      $region234: #{ema_als_forward.1} parent=226 // loop_exit
        _
    $region227: #{ema_als_forward.1} parent=1 // pred_fallthru
      _
    // Predicated region
    $region246: #{ema_als_forward.1} parent=1 // pred_check
      _
    $region247: #{ema_als_forward.1} parent=1 // pred_check_branch
      %403 = sbr.rel (0) target = $region249
    $region248: #{ema_als_forward.1} parent=1 // pred_region
      %404 = vsyncadd [#allocation3], 16
    $region249: #{ema_als_forward.1} parent=1 // pred_fallthru
      _
    %v405 = vld [vmem:[%s1] sm:$0xff]
    %v406 = vld [vmem:[%s2] sm:$0xff]
    %v407 = vlaneseq
    %v408 = vand.u32 %v407, 127
    %409 = vset.pattern.permute.xlu0 0
    %410 = vperm.xlu0 %409, %v406
    %v411 = vpop.permute.xlu0 %410
    %vm412 = vcmp.eq.s32.totalorder %v408, %v411
    %vm413 = vcmask 261120
    %v414 = vsel %vm413, %v405, -inf
    %415 = vmax.xlane.f32.xlu0 %v414
    %v416 = vpop.xlane.xlu0 %415
    %v417 = vsub.f32 %v405, %v416
    %v418 = vmul.f32 %v417, 1.442695
    %v419 = vpow.pop %v418
    %v420 = vsel %vm413, %v419, 0.0
    %421 = vadd.xlane.f32.xlu0 %v420
    %v422 = vpop.xlane.xlu0 %421
    %v423 = vlog2.pop %v422
    %v424 = vmul.f32 %v423, 0.6931472
    %v425 = vsub.f32 %v417, %v424
    %v426 = vsel %vm412, %v425, 0.0
    %v427 = vsel %vm413, %v426, 0.0
    %428 = vadd.xlane.f32.xlu0 %v427
    %v429 = vpop.xlane.xlu0 %428
    %v430 = vsel %vm413, %v425, 0.0
    %431 = vadd.xlane.f32.xlu0 %v430
    %v432 = vpop.xlane.xlu0 %431
    %v433 = vmul.f32 %v429, 0.5
    %v434 = vmul.f32 %v432, 0.015625
    %v435 = vadd.f32 %v433, %v434
    %p436 = scmp.eq.s32.totalorder 0, 0
    // Predicated region
    $region250: #{ema_als_forward.1} parent=1 // pred_check
      %p437 = pneg %p436
    $region251: #{ema_als_forward.1} parent=1 // pred_check_branch
      %439 = sbr.rel (%p437) target = $region253
    $region252: #{ema_als_forward.1} parent=1 // pred_region
      %vm440 = vcmask 0
      %441 = vst.msk [vmem:[#allocation6] sm:$0x1] %vm440, 0.0
    $region253: #{ema_als_forward.1} parent=1 // pred_fallthru
      _
    %v442 = vld [vmem:[#allocation6] sm:$0x1]
    %vm443 = vcmask 7168
    %v444 = vsel %vm443, %v435, 0.0
    %445 = vadd.xlane.f32.xlu0 %v444
    %v446 = vpop.xlane.xlu0 %445
    %v447 = vrot.slane %v446, 4
    %v448 = vadd.f32 %v446, %v447
    %v449 = vrot.slane %v448, 2
    %v450 = vadd.f32 %v448, %v449
    %v451 = vrot.slane %v450, 1
    %v452 = vadd.f32 %v450, %v451
    %s453 = vtos %v452
    %s454 = ssub.f32 0.0, %s453
    %v455 = vstv %s454
    %v456 = vadd.f32 %v442, %v455
    %vm457 = vcmask 0
    %458 = vst.msk [vmem:[#allocation6] sm:$0x1] %vm457, %v456
    // Predicated region
    $region254: #{ema_als_forward.1} parent=1 // pred_check
      %p459 = pneg %p436
    $region255: #{ema_als_forward.1} parent=1 // pred_check_branch
      %461 = sbr.rel (%p459) target = $region257
    $region256: #{ema_als_forward.1} parent=1 // pred_region
      %v462 = vld [vmem:[#allocation6] sm:$0x1]
      %v463 = vmul.f32 %v462, 0.125
      %464 = vst.msk [vmem:[#allocation6] sm:$0x1] %vm457, %v463
    $region257: #{ema_als_forward.1} parent=1 // pred_fallthru
      _
    %s465 = smul.u32 1, 1
    %s466 = sshll.u32 %s465, 4
    %467 = dma.done [#allocation3], %s466
    %s468 = sshll.u32 %s465, 4
    %469 = dma.done [#allocation3], %s468
    %s470 = sshll.u32 %s465, 4
    %471 = dma.done [#allocation3], %s470
    %s472 = sshll.u32 %s465, 4
    %473 = dma.done [#allocation3], %s472
    %s474 = sshll.u32 %s465, 4
    %475 = dma.done [#allocation3], %s474
    %s476 = sshll.u32 %s465, 4
    %477 = dma.done [#allocation3], %s476
    %s478 = sshll.u32 %s465, 4
    %479 = dma.done [#allocation3], %s478
    %s480 = sshll.u32 %s465, 4
    %481 = dma.done [#allocation3], %s480
    %v482 = vld [vmem:[#allocation2] sm:$0xff]
    %v483 = vmul.f32 %v482, 0.7
    %v484 = vmul.f32 %v405, 0.3
    %v485 = vadd.f32 %v483, %v484
    %486 = vst.msk [vmem:[#allocation2] sm:$0xff] %vm413, %v485
    %s487 = sld [smem:[#allocation5 + %s22]]
    %s488 = scalar_lea.vmem %s4, %s487
    %p490 = scmp.lt.u32.totalorder 1, 8
    %p491 = pneg %p490
    // Predicated region
    $region258: #{ema_als_forward.1} parent=1 // pred_check
      _
    $region259: #{ema_als_forward.1} parent=1 // pred_check_branch
      %493 = sbr.rel (%p490) target = $region261
    $region260: #{ema_als_forward.1} parent=1 // pred_region
      %s508 = sand.u32 1, 7
      %p509 = scmp.eq.s32.totalorder %s508, 0
      %p510 = pneg %p509
      // Predicated region
      $region273: #{ema_als_forward.1} parent=260 // pred_check
        _
      $region274: #{ema_als_forward.1} parent=260 // pred_check_branch
        %512 = sbr.rel (%p509) target = $region276
      $region275: #{ema_als_forward.1} parent=260 // pred_region
        %s513 = sand.u32 1, 7
        %s514 = ssub.s32 1, %s513
        %s515 = scalar_lea.vmem [#allocation2], %s514
        %s516 = ssub.s32 1, %s513
        %s517 = scalar_lea.vmem %s488, %s516
        %s518 = sshllo.u32 0, %s513
        loop: start=0, step=1, limit=1
        $region277: #{ema_als_forward.1} parent=275 // loop_pre_header
          _
        $region278: #{ema_als_forward.1} parent=275 // loop_header
          %s520 = sphi 0, %s524
          %p521 = scmp.ge.s32.totalorder %s520, 1
          %s525 = sphi %s515, %s515
          %s526 = sphi %s517, %s517
        $region279: #{ema_als_forward.1} parent=275 // loop_header_branch
          %523 = sbr.rel (%p521) target = $region283
        $region280: #{ema_als_forward.1} parent=275 // loop_body
          %v527 = vld [vmem:[%s525] sm:%s518]
          %528 = vst [vmem:[%s526] sm:%s518] %v527
        $region281: #{ema_als_forward.1} parent=275 // loop_footer
          %s524 = sadd.s32 1, %s520
        $region282: #{ema_als_forward.1} parent=275 // loop_footer_branch
          %519 = sbr.rel target = $region278
        $region283: #{ema_als_forward.1} parent=275 // loop_exit
          _
      $region276: #{ema_als_forward.1} parent=260 // pred_fallthru
        _
    $region261: #{ema_als_forward.1} parent=1 // pred_fallthru
      _
    // Predicated region
    $region262: #{ema_als_forward.1} parent=1 // pred_check
      %p494 = pneg %p490
    $region263: #{ema_als_forward.1} parent=1 // pred_check_branch
      %496 = sbr.rel (%p494) target = $region265
    $region264: #{ema_als_forward.1} parent=1 // pred_region
      %s497 = sshllo.u32 0, 1
      loop: start=0, step=1, limit=1
      $region266: #{ema_als_forward.1} parent=264 // loop_pre_header
        _
      $region267: #{ema_als_forward.1} parent=264 // loop_header
        %s499 = sphi 0, %s503
        %p500 = scmp.ge.s32.totalorder %s499, 1
        %s504 = sphi [#allocation2], [#allocation2]
        %s505 = sphi %s488, %s488
      $region268: #{ema_als_forward.1} parent=264 // loop_header_branch
        %502 = sbr.rel (%p500) target = $region272
      $region269: #{ema_als_forward.1} parent=264 // loop_body
        %v506 = vld [vmem:[%s504] sm:%s497]
        %507 = vst [vmem:[%s505] sm:%s497] %v506
      $region270: #{ema_als_forward.1} parent=264 // loop_footer
        %s503 = sadd.s32 1, %s499
      $region271: #{ema_als_forward.1} parent=264 // loop_footer_branch
        %498 = sbr.rel target = $region267
      $region272: #{ema_als_forward.1} parent=264 // loop_exit
        _
    $region265: #{ema_als_forward.1} parent=1 // pred_fallthru
      _
    // Predicated region
    $region284: #{ema_als_forward.1} parent=1 // pred_check
      _
    $region285: #{ema_als_forward.1} parent=1 // pred_check_branch
      %531 = sbr.rel (0) target = $region287
    $region286: #{ema_als_forward.1} parent=1 // pred_region
      %532 = vsyncadd [#allocation3], 16
    $region287: #{ema_als_forward.1} parent=1 // pred_fallthru
      _
    %s533 = sld [smem:[#allocation5 + %s69]]
    %s534 = scalar_lea.vmem %s4, %s533
    %p536 = scmp.lt.u32.totalorder 1, 8
    %p537 = pneg %p536
    // Predicated region
    $region288: #{ema_als_forward.1} parent=1 // pred_check
      _
    $region289: #{ema_als_forward.1} parent=1 // pred_check_branch
      %539 = sbr.rel (%p536) target = $region291
    $region290: #{ema_als_forward.1} parent=1 // pred_region
      %s554 = sand.u32 1, 7
      %p555 = scmp.eq.s32.totalorder %s554, 0
      %p556 = pneg %p555
      // Predicated region
      $region303: #{ema_als_forward.1} parent=290 // pred_check
        _
      $region304: #{ema_als_forward.1} parent=290 // pred_check_branch
        %558 = sbr.rel (%p555) target = $region306
      $region305: #{ema_als_forward.1} parent=290 // pred_region
        %s559 = sand.u32 1, 7
        %s560 = ssub.s32 1, %s559
        %s561 = scalar_lea.vmem %s72, %s560 [#allocation2]
        %s562 = ssub.s32 1, %s559
        %s563 = scalar_lea.vmem %s534, %s562
        %s564 = sshllo.u32 0, %s559
        loop: start=0, step=1, limit=1
        $region307: #{ema_als_forward.1} parent=305 // loop_pre_header
          _
        $region308: #{ema_als_forward.1} parent=305 // loop_header
          %s566 = sphi 0, %s570
          %p567 = scmp.ge.s32.totalorder %s566, 1
          %s571 = sphi %s561, %s561
          %s572 = sphi %s563, %s563
        $region309: #{ema_als_forward.1} parent=305 // loop_header_branch
          %569 = sbr.rel (%p567) target = $region313
        $region310: #{ema_als_forward.1} parent=305 // loop_body
          %v573 = vld [vmem:[%s571] sm:%s564]
          %574 = vst [vmem:[%s572] sm:%s564] %v573
        $region311: #{ema_als_forward.1} parent=305 // loop_footer
          %s570 = sadd.s32 1, %s566
        $region312: #{ema_als_forward.1} parent=305 // loop_footer_branch
          %565 = sbr.rel target = $region308
        $region313: #{ema_als_forward.1} parent=305 // loop_exit
          _
      $region306: #{ema_als_forward.1} parent=290 // pred_fallthru
        _
    $region291: #{ema_als_forward.1} parent=1 // pred_fallthru
      _
    // Predicated region
    $region292: #{ema_als_forward.1} parent=1 // pred_check
      %p540 = pneg %p536
    $region293: #{ema_als_forward.1} parent=1 // pred_check_branch
      %542 = sbr.rel (%p540) target = $region295
    $region294: #{ema_als_forward.1} parent=1 // pred_region
      %s543 = sshllo.u32 0, 1
      loop: start=0, step=1, limit=1
      $region296: #{ema_als_forward.1} parent=294 // loop_pre_header
        _
      $region297: #{ema_als_forward.1} parent=294 // loop_header
        %s545 = sphi 0, %s549
        %p546 = scmp.ge.s32.totalorder %s545, 1
        %s550 = sphi %s72, %s72
        %s551 = sphi %s534, %s534
      $region298: #{ema_als_forward.1} parent=294 // loop_header_branch
        %548 = sbr.rel (%p546) target = $region302
      $region299: #{ema_als_forward.1} parent=294 // loop_body
        %v552 = vld [vmem:[%s550] sm:%s543]
        %553 = vst [vmem:[%s551] sm:%s543] %v552
      $region300: #{ema_als_forward.1} parent=294 // loop_footer
        %s549 = sadd.s32 1, %s545
      $region301: #{ema_als_forward.1} parent=294 // loop_footer_branch
        %544 = sbr.rel target = $region297
      $region302: #{ema_als_forward.1} parent=294 // loop_exit
        _
    $region295: #{ema_als_forward.1} parent=1 // pred_fallthru
      _
    // Predicated region
    $region314: #{ema_als_forward.1} parent=1 // pred_check
      _
    $region315: #{ema_als_forward.1} parent=1 // pred_check_branch
      %577 = sbr.rel (0) target = $region317
    $region316: #{ema_als_forward.1} parent=1 // pred_region
      %578 = vsyncadd [#allocation3], 16
    $region317: #{ema_als_forward.1} parent=1 // pred_fallthru
      _
    %s579 = sld [smem:[#allocation5 + %s117]]
    %s580 = scalar_lea.vmem %s4, %s579
    %p582 = scmp.lt.u32.totalorder 1, 8
    %p583 = pneg %p582
    // Predicated region
    $region318: #{ema_als_forward.1} parent=1 // pred_check
      _
    $region319: #{ema_als_forward.1} parent=1 // pred_check_branch
      %585 = sbr.rel (%p582) target = $region321
    $region320: #{ema_als_forward.1} parent=1 // pred_region
      %s600 = sand.u32 1, 7
      %p601 = scmp.eq.s32.totalorder %s600, 0
      %p602 = pneg %p601
      // Predicated region
      $region333: #{ema_als_forward.1} parent=320 // pred_check
        _
      $region334: #{ema_als_forward.1} parent=320 // pred_check_branch
        %604 = sbr.rel (%p601) target = $region336
      $region335: #{ema_als_forward.1} parent=320 // pred_region
        %s605 = sand.u32 1, 7
        %s606 = ssub.s32 1, %s605
        %s607 = scalar_lea.vmem %s120, %s606 [#allocation2]
        %s608 = ssub.s32 1, %s605
        %s609 = scalar_lea.vmem %s580, %s608
        %s610 = sshllo.u32 0, %s605
        loop: start=0, step=1, limit=1
        $region337: #{ema_als_forward.1} parent=335 // loop_pre_header
          _
        $region338: #{ema_als_forward.1} parent=335 // loop_header
          %s612 = sphi 0, %s616
          %p613 = scmp.ge.s32.totalorder %s612, 1
          %s617 = sphi %s607, %s607
          %s618 = sphi %s609, %s609
        $region339: #{ema_als_forward.1} parent=335 // loop_header_branch
          %615 = sbr.rel (%p613) target = $region343
        $region340: #{ema_als_forward.1} parent=335 // loop_body
          %v619 = vld [vmem:[%s617] sm:%s610]
          %620 = vst [vmem:[%s618] sm:%s610] %v619
        $region341: #{ema_als_forward.1} parent=335 // loop_footer
          %s616 = sadd.s32 1, %s612
        $region342: #{ema_als_forward.1} parent=335 // loop_footer_branch
          %611 = sbr.rel target = $region338
        $region343: #{ema_als_forward.1} parent=335 // loop_exit
          _
      $region336: #{ema_als_forward.1} parent=320 // pred_fallthru
        _
    $region321: #{ema_als_forward.1} parent=1 // pred_fallthru
      _
    // Predicated region
    $region322: #{ema_als_forward.1} parent=1 // pred_check
      %p586 = pneg %p582
    $region323: #{ema_als_forward.1} parent=1 // pred_check_branch
      %588 = sbr.rel (%p586) target = $region325
    $region324: #{ema_als_forward.1} parent=1 // pred_region
      %s589 = sshllo.u32 0, 1
      loop: start=0, step=1, limit=1
      $region326: #{ema_als_forward.1} parent=324 // loop_pre_header
        _
      $region327: #{ema_als_forward.1} parent=324 // loop_header
        %s591 = sphi 0, %s595
        %p592 = scmp.ge.s32.totalorder %s591, 1
        %s596 = sphi %s120, %s120
        %s597 = sphi %s580, %s580
      $region328: #{ema_als_forward.1} parent=324 // loop_header_branch
        %594 = sbr.rel (%p592) target = $region332
      $region329: #{ema_als_forward.1} parent=324 // loop_body
        %v598 = vld [vmem:[%s596] sm:%s589]
        %599 = vst [vmem:[%s597] sm:%s589] %v598
      $region330: #{ema_als_forward.1} parent=324 // loop_footer
        %s595 = sadd.s32 1, %s591
      $region331: #{ema_als_forward.1} parent=324 // loop_footer_branch
        %590 = sbr.rel target = $region327
      $region332: #{ema_als_forward.1} parent=324 // loop_exit
        _
    $region325: #{ema_als_forward.1} parent=1 // pred_fallthru
      _
    // Predicated region
    $region344: #{ema_als_forward.1} parent=1 // pred_check
      _
    $region345: #{ema_als_forward.1} parent=1 // pred_check_branch
      %623 = sbr.rel (0) target = $region347
    $region346: #{ema_als_forward.1} parent=1 // pred_region
      %624 = vsyncadd [#allocation3], 16
    $region347: #{ema_als_forward.1} parent=1 // pred_fallthru
      _
    %s625 = sld [smem:[#allocation5 + %s165]]
    %s626 = scalar_lea.vmem %s4, %s625
    %p628 = scmp.lt.u32.totalorder 1, 8
    %p629 = pneg %p628
    // Predicated region
    $region348: #{ema_als_forward.1} parent=1 // pred_check
      _
    $region349: #{ema_als_forward.1} parent=1 // pred_check_branch
      %631 = sbr.rel (%p628) target = $region351
    $region350: #{ema_als_forward.1} parent=1 // pred_region
      %s646 = sand.u32 1, 7
      %p647 = scmp.eq.s32.totalorder %s646, 0
      %p648 = pneg %p647
      // Predicated region
      $region363: #{ema_als_forward.1} parent=350 // pred_check
        _
      $region364: #{ema_als_forward.1} parent=350 // pred_check_branch
        %650 = sbr.rel (%p647) target = $region366
      $region365: #{ema_als_forward.1} parent=350 // pred_region
        %s651 = sand.u32 1, 7
        %s652 = ssub.s32 1, %s651
        %s653 = scalar_lea.vmem %s168, %s652 [#allocation2]
        %s654 = ssub.s32 1, %s651
        %s655 = scalar_lea.vmem %s626, %s654
        %s656 = sshllo.u32 0, %s651
        loop: start=0, step=1, limit=1
        $region367: #{ema_als_forward.1} parent=365 // loop_pre_header
          _
        $region368: #{ema_als_forward.1} parent=365 // loop_header
          %s658 = sphi 0, %s662
          %p659 = scmp.ge.s32.totalorder %s658, 1
          %s663 = sphi %s653, %s653
          %s664 = sphi %s655, %s655
        $region369: #{ema_als_forward.1} parent=365 // loop_header_branch
          %661 = sbr.rel (%p659) target = $region373
        $region370: #{ema_als_forward.1} parent=365 // loop_body
          %v665 = vld [vmem:[%s663] sm:%s656]
          %666 = vst [vmem:[%s664] sm:%s656] %v665
        $region371: #{ema_als_forward.1} parent=365 // loop_footer
          %s662 = sadd.s32 1, %s658
        $region372: #{ema_als_forward.1} parent=365 // loop_footer_branch
          %657 = sbr.rel target = $region368
        $region373: #{ema_als_forward.1} parent=365 // loop_exit
          _
      $region366: #{ema_als_forward.1} parent=350 // pred_fallthru
        _
    $region351: #{ema_als_forward.1} parent=1 // pred_fallthru
      _
    // Predicated region
    $region352: #{ema_als_forward.1} parent=1 // pred_check
      %p632 = pneg %p628
    $region353: #{ema_als_forward.1} parent=1 // pred_check_branch
      %634 = sbr.rel (%p632) target = $region355
    $region354: #{ema_als_forward.1} parent=1 // pred_region
      %s635 = sshllo.u32 0, 1
      loop: start=0, step=1, limit=1
      $region356: #{ema_als_forward.1} parent=354 // loop_pre_header
        _
      $region357: #{ema_als_forward.1} parent=354 // loop_header
        %s637 = sphi 0, %s641
        %p638 = scmp.ge.s32.totalorder %s637, 1
        %s642 = sphi %s168, %s168
        %s643 = sphi %s626, %s626
      $region358: #{ema_als_forward.1} parent=354 // loop_header_branch
        %640 = sbr.rel (%p638) target = $region362
      $region359: #{ema_als_forward.1} parent=354 // loop_body
        %v644 = vld [vmem:[%s642] sm:%s635]
        %645 = vst [vmem:[%s643] sm:%s635] %v644
      $region360: #{ema_als_forward.1} parent=354 // loop_footer
        %s641 = sadd.s32 1, %s637
      $region361: #{ema_als_forward.1} parent=354 // loop_footer_branch
        %636 = sbr.rel target = $region357
      $region362: #{ema_als_forward.1} parent=354 // loop_exit
        _
    $region355: #{ema_als_forward.1} parent=1 // pred_fallthru
      _
    // Predicated region
    $region374: #{ema_als_forward.1} parent=1 // pred_check
      _
    $region375: #{ema_als_forward.1} parent=1 // pred_check_branch
      %669 = sbr.rel (0) target = $region377
    $region376: #{ema_als_forward.1} parent=1 // pred_region
      %670 = vsyncadd [#allocation3], 16
    $region377: #{ema_als_forward.1} parent=1 // pred_fallthru
      _
    %s671 = sld [smem:[#allocation5 + %s213]]
    %s672 = scalar_lea.vmem %s4, %s671
    %p674 = scmp.lt.u32.totalorder 1, 8
    %p675 = pneg %p674
    // Predicated region
    $region378: #{ema_als_forward.1} parent=1 // pred_check
      _
    $region379: #{ema_als_forward.1} parent=1 // pred_check_branch
      %677 = sbr.rel (%p674) target = $region381
    $region380: #{ema_als_forward.1} parent=1 // pred_region
      %s692 = sand.u32 1, 7
      %p693 = scmp.eq.s32.totalorder %s692, 0
      %p694 = pneg %p693
      // Predicated region
      $region393: #{ema_als_forward.1} parent=380 // pred_check
        _
      $region394: #{ema_als_forward.1} parent=380 // pred_check_branch
        %696 = sbr.rel (%p693) target = $region396
      $region395: #{ema_als_forward.1} parent=380 // pred_region
        %s697 = sand.u32 1, 7
        %s698 = ssub.s32 1, %s697
        %s699 = scalar_lea.vmem %s216, %s698 [#allocation2]
        %s700 = ssub.s32 1, %s697
        %s701 = scalar_lea.vmem %s672, %s700
        %s702 = sshllo.u32 0, %s697
        loop: start=0, step=1, limit=1
        $region397: #{ema_als_forward.1} parent=395 // loop_pre_header
          _
        $region398: #{ema_als_forward.1} parent=395 // loop_header
          %s704 = sphi 0, %s708
          %p705 = scmp.ge.s32.totalorder %s704, 1
          %s709 = sphi %s699, %s699
          %s710 = sphi %s701, %s701
        $region399: #{ema_als_forward.1} parent=395 // loop_header_branch
          %707 = sbr.rel (%p705) target = $region403
        $region400: #{ema_als_forward.1} parent=395 // loop_body
          %v711 = vld [vmem:[%s709] sm:%s702]
          %712 = vst [vmem:[%s710] sm:%s702] %v711
        $region401: #{ema_als_forward.1} parent=395 // loop_footer
          %s708 = sadd.s32 1, %s704
        $region402: #{ema_als_forward.1} parent=395 // loop_footer_branch
          %703 = sbr.rel target = $region398
        $region403: #{ema_als_forward.1} parent=395 // loop_exit
          _
      $region396: #{ema_als_forward.1} parent=380 // pred_fallthru
        _
    $region381: #{ema_als_forward.1} parent=1 // pred_fallthru
      _
    // Predicated region
    $region382: #{ema_als_forward.1} parent=1 // pred_check
      %p678 = pneg %p674
    $region383: #{ema_als_forward.1} parent=1 // pred_check_branch
      %680 = sbr.rel (%p678) target = $region385
    $region384: #{ema_als_forward.1} parent=1 // pred_region
      %s681 = sshllo.u32 0, 1
      loop: start=0, step=1, limit=1
      $region386: #{ema_als_forward.1} parent=384 // loop_pre_header
        _
      $region387: #{ema_als_forward.1} parent=384 // loop_header
        %s683 = sphi 0, %s687
        %p684 = scmp.ge.s32.totalorder %s683, 1
        %s688 = sphi %s216, %s216
        %s689 = sphi %s672, %s672
      $region388: #{ema_als_forward.1} parent=384 // loop_header_branch
        %686 = sbr.rel (%p684) target = $region392
      $region389: #{ema_als_forward.1} parent=384 // loop_body
        %v690 = vld [vmem:[%s688] sm:%s681]
        %691 = vst [vmem:[%s689] sm:%s681] %v690
      $region390: #{ema_als_forward.1} parent=384 // loop_footer
        %s687 = sadd.s32 1, %s683
      $region391: #{ema_als_forward.1} parent=384 // loop_footer_branch
        %682 = sbr.rel target = $region387
      $region392: #{ema_als_forward.1} parent=384 // loop_exit
        _
    $region385: #{ema_als_forward.1} parent=1 // pred_fallthru
      _
    // Predicated region
    $region404: #{ema_als_forward.1} parent=1 // pred_check
      _
    $region405: #{ema_als_forward.1} parent=1 // pred_check_branch
      %715 = sbr.rel (0) target = $region407
    $region406: #{ema_als_forward.1} parent=1 // pred_region
      %716 = vsyncadd [#allocation3], 16
    $region407: #{ema_als_forward.1} parent=1 // pred_fallthru
      _
    %s717 = sld [smem:[#allocation5 + %s261]]
    %s718 = scalar_lea.vmem %s4, %s717
    %p720 = scmp.lt.u32.totalorder 1, 8
    %p721 = pneg %p720
    // Predicated region
    $region408: #{ema_als_forward.1} parent=1 // pred_check
      _
    $region409: #{ema_als_forward.1} parent=1 // pred_check_branch
      %723 = sbr.rel (%p720) target = $region411
    $region410: #{ema_als_forward.1} parent=1 // pred_region
      %s738 = sand.u32 1, 7
      %p739 = scmp.eq.s32.totalorder %s738, 0
      %p740 = pneg %p739
      // Predicated region
      $region423: #{ema_als_forward.1} parent=410 // pred_check
        _
      $region424: #{ema_als_forward.1} parent=410 // pred_check_branch
        %742 = sbr.rel (%p739) target = $region426
      $region425: #{ema_als_forward.1} parent=410 // pred_region
        %s743 = sand.u32 1, 7
        %s744 = ssub.s32 1, %s743
        %s745 = scalar_lea.vmem %s264, %s744 [#allocation2]
        %s746 = ssub.s32 1, %s743
        %s747 = scalar_lea.vmem %s718, %s746
        %s748 = sshllo.u32 0, %s743
        loop: start=0, step=1, limit=1
        $region427: #{ema_als_forward.1} parent=425 // loop_pre_header
          _
        $region428: #{ema_als_forward.1} parent=425 // loop_header
          %s750 = sphi 0, %s754
          %p751 = scmp.ge.s32.totalorder %s750, 1
          %s755 = sphi %s745, %s745
          %s756 = sphi %s747, %s747
        $region429: #{ema_als_forward.1} parent=425 // loop_header_branch
          %753 = sbr.rel (%p751) target = $region433
        $region430: #{ema_als_forward.1} parent=425 // loop_body
          %v757 = vld [vmem:[%s755] sm:%s748]
          %758 = vst [vmem:[%s756] sm:%s748] %v757
        $region431: #{ema_als_forward.1} parent=425 // loop_footer
          %s754 = sadd.s32 1, %s750
        $region432: #{ema_als_forward.1} parent=425 // loop_footer_branch
          %749 = sbr.rel target = $region428
        $region433: #{ema_als_forward.1} parent=425 // loop_exit
          _
      $region426: #{ema_als_forward.1} parent=410 // pred_fallthru
        _
    $region411: #{ema_als_forward.1} parent=1 // pred_fallthru
      _
    // Predicated region
    $region412: #{ema_als_forward.1} parent=1 // pred_check
      %p724 = pneg %p720
    $region413: #{ema_als_forward.1} parent=1 // pred_check_branch
      %726 = sbr.rel (%p724) target = $region415
    $region414: #{ema_als_forward.1} parent=1 // pred_region
      %s727 = sshllo.u32 0, 1
      loop: start=0, step=1, limit=1
      $region416: #{ema_als_forward.1} parent=414 // loop_pre_header
        _
      $region417: #{ema_als_forward.1} parent=414 // loop_header
        %s729 = sphi 0, %s733
        %p730 = scmp.ge.s32.totalorder %s729, 1
        %s734 = sphi %s264, %s264
        %s735 = sphi %s718, %s718
      $region418: #{ema_als_forward.1} parent=414 // loop_header_branch
        %732 = sbr.rel (%p730) target = $region422
      $region419: #{ema_als_forward.1} parent=414 // loop_body
        %v736 = vld [vmem:[%s734] sm:%s727]
        %737 = vst [vmem:[%s735] sm:%s727] %v736
      $region420: #{ema_als_forward.1} parent=414 // loop_footer
        %s733 = sadd.s32 1, %s729
      $region421: #{ema_als_forward.1} parent=414 // loop_footer_branch
        %728 = sbr.rel target = $region417
      $region422: #{ema_als_forward.1} parent=414 // loop_exit
        _
    $region415: #{ema_als_forward.1} parent=1 // pred_fallthru
      _
    // Predicated region
    $region434: #{ema_als_forward.1} parent=1 // pred_check
      _
    $region435: #{ema_als_forward.1} parent=1 // pred_check_branch
      %761 = sbr.rel (0) target = $region437
    $region436: #{ema_als_forward.1} parent=1 // pred_region
      %762 = vsyncadd [#allocation3], 16
    $region437: #{ema_als_forward.1} parent=1 // pred_fallthru
      _
    %s763 = sld [smem:[#allocation5 + %s309]]
    %s764 = scalar_lea.vmem %s4, %s763
    %p766 = scmp.lt.u32.totalorder 1, 8
    %p767 = pneg %p766
    // Predicated region
    $region438: #{ema_als_forward.1} parent=1 // pred_check
      _
    $region439: #{ema_als_forward.1} parent=1 // pred_check_branch
      %769 = sbr.rel (%p766) target = $region441
    $region440: #{ema_als_forward.1} parent=1 // pred_region
      %s784 = sand.u32 1, 7
      %p785 = scmp.eq.s32.totalorder %s784, 0
      %p786 = pneg %p785
      // Predicated region
      $region453: #{ema_als_forward.1} parent=440 // pred_check
        _
      $region454: #{ema_als_forward.1} parent=440 // pred_check_branch
        %788 = sbr.rel (%p785) target = $region456
      $region455: #{ema_als_forward.1} parent=440 // pred_region
        %s789 = sand.u32 1, 7
        %s790 = ssub.s32 1, %s789
        %s791 = scalar_lea.vmem %s312, %s790 [#allocation2]
        %s792 = ssub.s32 1, %s789
        %s793 = scalar_lea.vmem %s764, %s792
        %s794 = sshllo.u32 0, %s789
        loop: start=0, step=1, limit=1
        $region457: #{ema_als_forward.1} parent=455 // loop_pre_header
          _
        $region458: #{ema_als_forward.1} parent=455 // loop_header
          %s796 = sphi 0, %s800
          %p797 = scmp.ge.s32.totalorder %s796, 1
          %s801 = sphi %s791, %s791
          %s802 = sphi %s793, %s793
        $region459: #{ema_als_forward.1} parent=455 // loop_header_branch
          %799 = sbr.rel (%p797) target = $region463
        $region460: #{ema_als_forward.1} parent=455 // loop_body
          %v803 = vld [vmem:[%s801] sm:%s794]
          %804 = vst [vmem:[%s802] sm:%s794] %v803
        $region461: #{ema_als_forward.1} parent=455 // loop_footer
          %s800 = sadd.s32 1, %s796
        $region462: #{ema_als_forward.1} parent=455 // loop_footer_branch
          %795 = sbr.rel target = $region458
        $region463: #{ema_als_forward.1} parent=455 // loop_exit
          _
      $region456: #{ema_als_forward.1} parent=440 // pred_fallthru
        _
    $region441: #{ema_als_forward.1} parent=1 // pred_fallthru
      _
    // Predicated region
    $region442: #{ema_als_forward.1} parent=1 // pred_check
      %p770 = pneg %p766
    $region443: #{ema_als_forward.1} parent=1 // pred_check_branch
      %772 = sbr.rel (%p770) target = $region445
    $region444: #{ema_als_forward.1} parent=1 // pred_region
      %s773 = sshllo.u32 0, 1
      loop: start=0, step=1, limit=1
      $region446: #{ema_als_forward.1} parent=444 // loop_pre_header
        _
      $region447: #{ema_als_forward.1} parent=444 // loop_header
        %s775 = sphi 0, %s779
        %p776 = scmp.ge.s32.totalorder %s775, 1
        %s780 = sphi %s312, %s312
        %s781 = sphi %s764, %s764
      $region448: #{ema_als_forward.1} parent=444 // loop_header_branch
        %778 = sbr.rel (%p776) target = $region452
      $region449: #{ema_als_forward.1} parent=444 // loop_body
        %v782 = vld [vmem:[%s780] sm:%s773]
        %783 = vst [vmem:[%s781] sm:%s773] %v782
      $region450: #{ema_als_forward.1} parent=444 // loop_footer
        %s779 = sadd.s32 1, %s775
      $region451: #{ema_als_forward.1} parent=444 // loop_footer_branch
        %774 = sbr.rel target = $region447
      $region452: #{ema_als_forward.1} parent=444 // loop_exit
        _
    $region445: #{ema_als_forward.1} parent=1 // pred_fallthru
      _
    // Predicated region
    $region464: #{ema_als_forward.1} parent=1 // pred_check
      _
    $region465: #{ema_als_forward.1} parent=1 // pred_check_branch
      %807 = sbr.rel (0) target = $region467
    $region466: #{ema_als_forward.1} parent=1 // pred_region
      %808 = vsyncadd [#allocation3], 16
    $region467: #{ema_als_forward.1} parent=1 // pred_fallthru
      _
    %s809 = sld [smem:[#allocation5 + %s357]]
    %s810 = scalar_lea.vmem %s4, %s809
    %p812 = scmp.lt.u32.totalorder 1, 8
    %p813 = pneg %p812
    // Predicated region
    $region468: #{ema_als_forward.1} parent=1 // pred_check
      _
    $region469: #{ema_als_forward.1} parent=1 // pred_check_branch
      %815 = sbr.rel (%p812) target = $region471
    $region470: #{ema_als_forward.1} parent=1 // pred_region
      %s830 = sand.u32 1, 7
      %p831 = scmp.eq.s32.totalorder %s830, 0
      %p832 = pneg %p831
      // Predicated region
      $region483: #{ema_als_forward.1} parent=470 // pred_check
        _
      $region484: #{ema_als_forward.1} parent=470 // pred_check_branch
        %834 = sbr.rel (%p831) target = $region486
      $region485: #{ema_als_forward.1} parent=470 // pred_region
        %s835 = sand.u32 1, 7
        %s836 = ssub.s32 1, %s835
        %s837 = scalar_lea.vmem %s360, %s836 [#allocation2]
        %s838 = ssub.s32 1, %s835
        %s839 = scalar_lea.vmem %s810, %s838
        %s840 = sshllo.u32 0, %s835
        loop: start=0, step=1, limit=1
        $region487: #{ema_als_forward.1} parent=485 // loop_pre_header
          _
        $region488: #{ema_als_forward.1} parent=485 // loop_header
          %s842 = sphi 0, %s846
          %p843 = scmp.ge.s32.totalorder %s842, 1
          %s847 = sphi %s837, %s837
          %s848 = sphi %s839, %s839
        $region489: #{ema_als_forward.1} parent=485 // loop_header_branch
          %845 = sbr.rel (%p843) target = $region493
        $region490: #{ema_als_forward.1} parent=485 // loop_body
          %v849 = vld [vmem:[%s847] sm:%s840]
          %850 = vst [vmem:[%s848] sm:%s840] %v849
        $region491: #{ema_als_forward.1} parent=485 // loop_footer
          %s846 = sadd.s32 1, %s842
        $region492: #{ema_als_forward.1} parent=485 // loop_footer_branch
          %841 = sbr.rel target = $region488
        $region493: #{ema_als_forward.1} parent=485 // loop_exit
          _
      $region486: #{ema_als_forward.1} parent=470 // pred_fallthru
        _
    $region471: #{ema_als_forward.1} parent=1 // pred_fallthru
      _
    // Predicated region
    $region472: #{ema_als_forward.1} parent=1 // pred_check
      %p816 = pneg %p812
    $region473: #{ema_als_forward.1} parent=1 // pred_check_branch
      %818 = sbr.rel (%p816) target = $region475
    $region474: #{ema_als_forward.1} parent=1 // pred_region
      %s819 = sshllo.u32 0, 1
      loop: start=0, step=1, limit=1
      $region476: #{ema_als_forward.1} parent=474 // loop_pre_header
        _
      $region477: #{ema_als_forward.1} parent=474 // loop_header
        %s821 = sphi 0, %s825
        %p822 = scmp.ge.s32.totalorder %s821, 1
        %s826 = sphi %s360, %s360
        %s827 = sphi %s810, %s810
      $region478: #{ema_als_forward.1} parent=474 // loop_header_branch
        %824 = sbr.rel (%p822) target = $region482
      $region479: #{ema_als_forward.1} parent=474 // loop_body
        %v828 = vld [vmem:[%s826] sm:%s819]
        %829 = vst [vmem:[%s827] sm:%s819] %v828
      $region480: #{ema_als_forward.1} parent=474 // loop_footer
        %s825 = sadd.s32 1, %s821
      $region481: #{ema_als_forward.1} parent=474 // loop_footer_branch
        %820 = sbr.rel target = $region477
      $region482: #{ema_als_forward.1} parent=474 // loop_exit
        _
    $region475: #{ema_als_forward.1} parent=1 // pred_fallthru
      _
    // Predicated region
    $region494: #{ema_als_forward.1} parent=1 // pred_check
      _
    $region495: #{ema_als_forward.1} parent=1 // pred_check_branch
      %853 = sbr.rel (0) target = $region497
    $region496: #{ema_als_forward.1} parent=1 // pred_region
      %854 = vsyncadd [#allocation3], 16
    $region497: #{ema_als_forward.1} parent=1 // pred_fallthru
      _
    %s855 = sshll.u32 %s465, 4
    %856 = dma.done [#allocation3], %s855
    %s857 = sshll.u32 %s465, 4
    %858 = dma.done [#allocation3], %s857
    %s859 = sshll.u32 %s465, 4
    %860 = dma.done [#allocation3], %s859
    %s861 = sshll.u32 %s465, 4
    %862 = dma.done [#allocation3], %s861
    %s863 = sshll.u32 %s465, 4
    %864 = dma.done [#allocation3], %s863
    %s865 = sshll.u32 %s465, 4
    %866 = dma.done [#allocation3], %s865
    %s867 = sshll.u32 %s465, 4
    %868 = dma.done [#allocation3], %s867
    %s869 = sshll.u32 %s465, 4
    %870 = dma.done [#allocation3], %s869
    // Predicated region
    $region498: #{ema_als_forward.1} parent=1 // pred_check
      _
    $region499: #{ema_als_forward.1} parent=1 // pred_check_branch
      %872 = sbr.rel (0) target = $region501
    $region500: #{ema_als_forward.1} parent=1 // pred_region
      %s874 = ssub.s32 16, 16
      %875 = vsyncadd [#allocation7], %s874
      %s877 = sshll.u32 [#allocation6], 4
      %s878 = int_to_ptr.vmem [resolvable:$true] %s877
      %880 = dma.vmem_to_hbm [thread:$0]  %s878, 16, %s5, [#allocation7]
    $region501: #{ema_als_forward.1} parent=1 // pred_fallthru
      _
    // Predicated region
    $region502: #{ema_als_forward.1} parent=1 // pred_check
      _
    $region503: #{ema_als_forward.1} parent=1 // pred_check_branch
      %882 = sbr.rel (0) target = $region505
    $region504: #{ema_als_forward.1} parent=1 // pred_region
      %883 = dma.done [#allocation7], 16
    $region505: #{ema_als_forward.1} parent=1 // pred_fallthru
      _
    %884 = vsyncpa [#allocation7], 1
  %885 = vsyncmov [#allocation3]
  %s886 = vpop.sfrf %885
  %p887 = scmp.eq.s32.totalorder %s886, 0
  %p888 = pneg %p887
  %890 = shalt.err (%p888)

</llo_original>
